<compile_context>
chip_gen: v7x
topology: tpu7x:2x2x1
jax: 0.10.0
libtpu: 0.0.40
codegen_flags: <defaults>
</compile_context>

<pallas_src>
import functools

import jax
import jax.numpy as jnp
from jax.experimental import pallas as pl
from jax.experimental.pallas import tpu as pltpu


def _cdiv(a, b):
    return -(-a // b)


# ----------------------------------------------------------------------------
# Fused Pallas kernel (one block of TB samples per grid step)
# ----------------------------------------------------------------------------
def pitom_fused_kernel(xcol_ref, w1_ref, w2_ref, w3_ref, aff_ref, fcw_ref,
                       fcb_ref, o_ref, h1_ref, p1_ref, c2_ref,
                       *, tb, hp, t3, k2, k3):
    """Full PITOM forward for TB samples stacked along the matmul M dim.

    xcol_ref: (TB*t1p, k1*Cin) bf16  conv1 im2col LHS (built in the wrapper)
    w1_ref  : (k1*Cin, 128)    bf16  conv1 weight, tap-fused
    w2_ref  : (k2*128, 128)    bf16  conv2 weight, tap-fused
    w3_ref  : (k3*128, 128)    bf16  conv3 weight, tap-fused, BN2 scale folded
    aff_ref : (8, 128)         f32   rows = [s1, t1, s3, t3, bias3+BN2shift, 0..]
    fcw_ref : (128, NCpad)     bf16  fc weight
    fcb_ref : (1, NCpad)       f32   fc bias
    o_ref   : (TB, NCpad)      f32   per-sample logits (lane-dense)
    h1_ref  : (TB*t1p, 128)    f32   scratch: conv1 post-BN activations
    p1_ref  : (TB*hp+pad, 128) f32   scratch: max-pooled activations
    c2_ref  : (TB*hp+pad, 128) f32   scratch: conv2 ReLU activations (pre-BN2)
    """
    f32, bf16 = jnp.float32, jnp.bfloat16
    c_out = w1_ref.shape[-1]
    m = tb * hp                              # pooled rows held per grid step

    # ---- conv1 -> ReLU -> BN1 : one tap-fused matmul over TB stacked samples --
    acc1 = jnp.dot(xcol_ref[...], w1_ref[...], preferred_element_type=f32)
    h1_ref[...] = jnp.maximum(acc1, 0.0) * aff_ref[0:1, :] + aff_ref[1:2, :]

    # ---- MaxPool1d(2): two stride-2 reads from VMEM + elementwise max ---------
    even = h1_ref[pl.ds(0, m, stride=2), :]
    odd = h1_ref[pl.ds(1, m, stride=2), :]
    p1_ref[pl.ds(0, m), :] = jnp.maximum(even, odd)

    # ---- conv2 -> ReLU (BN2 is folded into conv3's weight/bias) ---------------
    l2 = jnp.concatenate([p1_ref[pl.ds(k, m), :] for k in range(k2)], axis=-1)
    acc2 = jnp.dot(l2.astype(bf16), w2_ref[...], preferred_element_type=f32)
    c2_ref[pl.ds(0, m), :] = jnp.maximum(acc2, 0.0)

    # ---- conv3 (+bias incl. folded BN2 shift) -> ReLU -> BN3 ------------------
    l3 = jnp.concatenate([c2_ref[pl.ds(k, m), :] for k in range(k3)], axis=-1)
    acc3 = jnp.dot(l3.astype(bf16), w3_ref[...], preferred_element_type=f32)
    h3 = (jnp.maximum(acc3 + aff_ref[4:5, :], 0.0) * aff_ref[2:3, :]
          + aff_ref[3:4, :])

    # ---- per-sample global max over valid time rows + fc ----------------------
    h3 = h3.reshape(tb, hp, c_out)                       # hp is 8-row aligned
    t_idx = jax.lax.broadcasted_iota(jnp.int32, (tb, hp, 1), 1)
    feat = jnp.max(jnp.where(t_idx < t3, h3, -jnp.inf), axis=1)   # (TB, 128)
    logits = jnp.dot(feat.astype(bf16), fcw_ref[...],
                     preferred_element_type=f32)
    o_ref[...] = logits + fcb_ref[...]


# ----------------------------------------------------------------------------
# Forward wrapper
# ----------------------------------------------------------------------------
def pitom_forward(x, params, num_classes, block_b=64):
    """x: (B, T, num_electrodes) f32 -> logits (B, num_classes)."""
    B, T, c_in = x.shape
    w1, w2, w3 = params["w1"], params["w2"], params["w3"]
    c_out = w1.shape[-1]
    k1 = w1.shape[0] // c_in
    k2 = w2.shape[0] // c_out
    k3 = w3.shape[0] // c_out
    nc_pad = params["fc_w"].shape[-1]

    t1 = T - k1 + 1            # conv1 output length
    tp = t1 // 2               # after MaxPool1d(kernel_size=2)
    t2 = tp - k2 + 1           # conv2 output length
    t3 = t2 - k3 + 1           # conv3 output length
    assert t3 >= 1, "sequence too short for PITOM receptive field"

    t1p = _cdiv(t1, 16) * 16             # pad so hp = t1p//2 stays 8-row aligned
    hp = t1p // 2
    extra = _cdiv(max(k2, k3) - 1, 8) * 8   # scratch tail rows for shifted windows

    # ---- batch blocking: TB samples per step, >=2 even steps (v7x 2 TCs) -------
    if B >= 2:
        num_steps = max(2, _cdiv(B, block_b))
        if num_steps % 2:
            num_steps += 1
    else:
        num_steps = 1
    tb = _cdiv(B, num_steps)
    b_pad = num_steps * tb

    # ---- conv1 im2col in the wrapper: lane-dense (k1*c_in) bf16 LHS ------------
    xcol = jnp.concatenate([x[:, k:k + t1, :] for k in range(k1)], axis=-1)
    xcol = jnp.pad(xcol, ((0, b_pad - B), (0, t1p - t1), (0, 0)))
    xcol = xcol.reshape(b_pad * t1p, k1 * c_in).astype(jnp.bfloat16)

    kernel = functools.partial(pitom_fused_kernel,
                               tb=tb, hp=hp, t3=t3, k2=k2, k3=k3)

    flops = 2 * b_pad * (t1p * k1 * c_in * c_out
                         + hp * (k2 + k3) * c_out * c_out
                         + c_out * nc_pad)
    bytes_accessed = (xcol.size * 2 + (w1.size + w2.size + w3.size) * 2
                      + params["affine"].size * 4
                      + params["fc_w"].size * 2 + params["fc_b"].size * 4
                      + b_pad * nc_pad * 4)

    out = pl.pallas_call(
        kernel,
        out_shape=jax.ShapeDtypeStruct((num_steps, tb, nc_pad), jnp.float32),
        grid=(num_steps,),
        in_specs=[
            pl.BlockSpec((tb * t1p, k1 * c_in), lambda i: (i, 0)),   # conv1 im2col
            pl.BlockSpec((k1 * c_in, c_out), lambda i: (0, 0)),      # w1 (resident)
            pl.BlockSpec((k2 * c_out, c_out), lambda i: (0, 0)),     # w2 (resident)
            pl.BlockSpec((k3 * c_out, c_out), lambda i: (0, 0)),     # w3 (resident)
            pl.BlockSpec((8, c_out), lambda i: (0, 0)),              # scale/shift/bias
            pl.BlockSpec((c_out, nc_pad), lambda i: (0, 0)),         # fc weight
            pl.BlockSpec((1, nc_pad), lambda i: (0, 0)),             # fc bias
        ],
        out_specs=pl.BlockSpec((None, tb, nc_pad), lambda i: (i, 0, 0)),
        scratch_shapes=[
            pltpu.VMEM((tb * t1p, c_out), jnp.float32),          # conv1/BN1 acts
            pltpu.VMEM((tb * hp + extra, c_out), jnp.float32),   # pooled acts
            pltpu.VMEM((tb * hp + extra, c_out), jnp.float32),   # conv2 ReLU acts
        ],
        compiler_params=pltpu.CompilerParams(
            dimension_semantics=("parallel",),   # shard steps across v7x's 2 TCs
            vmem_limit_bytes=32 * 1024 * 1024,   # fits v7x 64 MiB w/ headroom
        ),
        cost_estimate=pl.CostEstimate(flops=int(flops), transcendentals=0,
                                      bytes_accessed=int(bytes_accessed)),
    )(xcol, w1, w2, w3, params["affine"], params["fc_w"], params["fc_b"])

    return out.reshape(b_pad, nc_pad)[:B, :num_classes]


# ----------------------------------------------------------------------------
# One-time parameter preparation (hoisted out of the forward hot path)
# ----------------------------------------------------------------------------
def prepare_params(raw, eps=1e-5):
    """Fold BN into scale/shift, fold BN2 into conv3, flatten conv weights to
    (K*Cin, Cout) bf16 (tap-fused contraction), pad fc to 128 lanes."""
    def fold(g, b, m, v):
        s = g / jnp.sqrt(v + eps)
        return s, b - m * s

    s1, t1s = fold(raw["bn1_g"], raw["bn1_b"], raw["bn1_m"], raw["bn1_v"])
    s2, t2s = fold(raw["bn2_g"], raw["bn2_b"], raw["bn2_m"], raw["bn2_v"])
    s3, t3s = fold(raw["bn3_g"], raw["bn3_b"], raw["bn3_m"], raw["bn3_v"])

    def tap_major(w_oik):                    # (Cout, Cin, K) -> (K, Cin, Cout)
        return jnp.transpose(w_oik, (2, 1, 0))

    w1 = tap_major(raw["w1"])
    w2 = tap_major(raw["w2"])
    w3 = tap_major(raw["w3"])

    # Fold BN2 (between conv2-ReLU and conv3) into conv3's weight and bias.
    b3f = raw["b3"] + jnp.einsum("c,kco->o", t2s, w3)
    w3f = w3 * s2[None, :, None]

    def flat(w):                             # (K, Cin, Cout) -> (K*Cin, Cout) bf16
        k, ci, co = w.shape
        return w.reshape(k * ci, co).astype(jnp.bfloat16)

    zeros = jnp.zeros_like(b3f)
    affine = jnp.stack([s1, t1s, s3, t3s, b3f, zeros, zeros, zeros],
                       axis=0).astype(jnp.float32)               # (8, 128)

    num_classes, d_in = raw["fc_w"].shape
    nc_pad = ((num_classes + 127) // 128) * 128                  # lane-dense output
    fc_w = jnp.zeros((d_in, nc_pad), jnp.float32)
    fc_w = fc_w.at[:, :num_classes].set(raw["fc_w"].T.astype(jnp.float32))
    fc_b = jnp.zeros((1, nc_pad), jnp.float32)
    fc_b = fc_b.at[0, :num_classes].set(raw["fc_b"].astype(jnp.float32))

    return {"w1": flat(w1), "w2": flat(w2), "w3": flat(w3f),
            "affine": affine, "fc_w": fc_w.astype(jnp.bfloat16), "fc_b": fc_b}


def init_raw_params(key, num_classes, num_electrodes):
    ks = jax.random.split(key, 18)
    f32 = jnp.float32

    def bn(kg, kb, km, kv, c=128):
        return (1.0 + 0.1 * jax.random.normal(kg, (c,), f32),
                0.1 * jax.random.normal(kb, (c,), f32),
                0.05 * jax.random.normal(km, (c,), f32),
                0.5 + 0.1 * jnp.abs(jax.random.normal(kv, (c,), f32)))

    bn1_g, bn1_b, bn1_m, bn1_v = bn(ks[1], ks[2], ks[3], ks[4])
    bn2_g, bn2_b, bn2_m, bn2_v = bn(ks[6], ks[7], ks[8], ks[9])
    bn3_g, bn3_b, bn3_m, bn3_v = bn(ks[11], ks[12], ks[13], ks[14])
    return {
        "w1": 0.05 * jax.random.normal(ks[0], (128, num_electrodes, 9), f32),
        "bn1_g": bn1_g, "bn1_b": bn1_b, "bn1_m": bn1_m, "bn1_v": bn1_v,
        "w2": 0.05 * jax.random.normal(ks[5], (128, 128, 4), f32),
        "bn2_g": bn2_g, "bn2_b": bn2_b, "bn2_m": bn2_m, "bn2_v": bn2_v,
        "w3": 0.05 * jax.random.normal(ks[10], (128, 128, 8), f32),
        "b3": 0.05 * jax.random.normal(ks[15], (128,), f32),
        "bn3_g": bn3_g, "bn3_b": bn3_b, "bn3_m": bn3_m, "bn3_v": bn3_v,
        "fc_w": 0.05 * jax.random.normal(ks[16], (num_classes, 128), f32),
        "fc_b": 0.05 * jax.random.normal(ks[17], (num_classes,), f32),
    }


# ----------------------------------------------------------------------------
# Pure-JAX f32 reference (eval-mode PyTorch semantics) for a correctness check
# ----------------------------------------------------------------------------
def pitom_reference(x, raw, eps=1e-5):
    hi = jax.lax.Precision.HIGHEST

    def conv1d(h, w_oik, bias=None):
        c_o, c_i, k = w_oik.shape
        t_out = h.shape[1] - k + 1
        wm = jnp.transpose(w_oik, (2, 1, 0))             # (K, Cin, Cout)
        out = jnp.zeros((h.shape[0], t_out, c_o), jnp.float32)
        for i in range(k):
            out = out + jnp.einsum("btc,co->bto", h[:, i:i + t_out, :], wm[i],
                                   precision=hi)
        return out if bias is None else out + bias

    def bn(h, g, b, m, v):
        return (h - m) / jnp.sqrt(v + eps) * g + b

    h = bn(jnp.maximum(conv1d(x, raw["w1"]), 0.0),
           raw["bn1_g"], raw["bn1_b"], raw["bn1_m"], raw["bn1_v"])
    B, T, C = h.shape
    h = h[:, :(T // 2) * 2, :].reshape(B, T // 2, 2, C).max(axis=2)   # MaxPool1d(2)
    h = bn(jnp.maximum(conv1d(h, raw["w2"]), 0.0),
           raw["bn2_g"], raw["bn2_b"], raw["bn2_m"], raw["bn2_v"])
    h = bn(jnp.maximum(conv1d(h, raw["w3"], raw["b3"]), 0.0),
           raw["bn3_g"], raw["bn3_b"], raw["bn3_m"], raw["bn3_v"])
    h = h.max(axis=1)                                                 # global max
    return jnp.dot(h, raw["fc_w"].T, precision=hi) + raw["fc_b"]


if __name__ == "__main__":
    num_classes = 10
    num_electrodes = 8
    B, T = 4, 40        # T=40: conv1->32, pool->16, conv2->13, conv3->6

    key = jax.random.PRNGKey(0)
    k_x, k_p = jax.random.split(key)
    x = jax.random.normal(k_x, (B, T, num_electrodes), jnp.float32)
    raw = init_raw_params(k_p, num_classes, num_electrodes)
    params = prepare_params(raw)     # one-time weight/BN folding (not in hot path)

    fwd = jax.jit(functools.partial(pitom_forward, num_classes=num_classes))
    logits = fwd(x, params)
    jax.block_until_ready(logits)

    assert logits.shape == (B, num_classes)
    ref = pitom_reference(x, raw)
    err = float(jnp.max(jnp.abs(logits - ref)))
    assert err < 7.5e-2, f"max |pallas - reference| = {err}"
    print("KERNEL_OK")
</pallas_src>

<mosaic_0001>
module attributes {stable_mosaic.version = 11 : i64} {
  func.func @pitom_fused_kernel(%arg0: i32, %arg1: memref<64x72xbf16, #tpu.memory_space<vmem>>, %arg2: memref<72x128xbf16, #tpu.memory_space<vmem>>, %arg3: memref<512x128xbf16, #tpu.memory_space<vmem>>, %arg4: memref<1024x128xbf16, #tpu.memory_space<vmem>>, %arg5: memref<8x128xf32, #tpu.memory_space<vmem>>, %arg6: memref<128x128xbf16, #tpu.memory_space<vmem>>, %arg7: memref<1x128xf32, #tpu.memory_space<vmem>>, %arg8: memref<1x2x128xf32, #tpu.memory_space<vmem>>, %arg9: memref<64x128xf32, #tpu.memory_space<vmem>>, %arg10: memref<40x128xf32, #tpu.memory_space<vmem>>, %arg11: memref<40x128xf32, #tpu.memory_space<vmem>>) attributes {dimension_semantics = [#tpu.dimension_semantics<parallel>], iteration_bounds = array<i64: 2>, scalar_prefetch = 0 : i64, scratch_operands = 3 : i64, tpu.core_type = #tpu.core_type<tc>, window_params = [{transform_indices = @transform_0, window_bounds = array<i64: 64, 72>}, {pipeline_mode = #tpu.pipeline_mode<synchronous>, transform_indices = @transform_1, window_bounds = array<i64: 72, 128>}, {pipeline_mode = #tpu.pipeline_mode<synchronous>, transform_indices = @transform_2, window_bounds = array<i64: 512, 128>}, {pipeline_mode = #tpu.pipeline_mode<synchronous>, transform_indices = @transform_3, window_bounds = array<i64: 1024, 128>}, {pipeline_mode = #tpu.pipeline_mode<synchronous>, transform_indices = @transform_4, window_bounds = array<i64: 8, 128>}, {pipeline_mode = #tpu.pipeline_mode<synchronous>, transform_indices = @transform_5, window_bounds = array<i64: 128, 128>}, {pipeline_mode = #tpu.pipeline_mode<synchronous>, transform_indices = @transform_6, window_bounds = array<i64: 1, 128>}, {transform_indices = @transform_7, window_bounds = array<i64: 1, 2, 128>}]} {
    %c0 = arith.constant 0 : index
    %c0_0 = arith.constant 0 : index
    %0 = vector.load %arg1[%c0, %c0_0] : memref<64x72xbf16, #tpu.memory_space<vmem>>, vector<64x72xbf16>
    %c0_1 = arith.constant 0 : index
    %c0_2 = arith.constant 0 : index
    %1 = vector.load %arg2[%c0_1, %c0_2] : memref<72x128xbf16, #tpu.memory_space<vmem>>, vector<72x128xbf16>
    %cst = arith.constant dense<0.000000e+00> : vector<64x128xf32>
    %2 = tpu.matmul %0, %1, %cst {dimension_numbers = #tpu.dot_dimension_numbers<[1], [0], [0], [1], [0, 0, 1, 1], [], []>} : vector<64x72xbf16>, vector<72x128xbf16>, vector<64x128xf32> -> vector<64x128xf32>
    %cst_3 = arith.constant 0.000000e+00 : f32
    %3 = vector.broadcast %cst_3 : f32 to vector<64x128xf32>
    %4 = arith.maximumf %2, %3 : vector<64x128xf32>
    %c0_4 = arith.constant 0 : index
    %c0_5 = arith.constant 0 : index
    %5 = vector.load %arg5[%c0_4, %c0_5] : memref<8x128xf32, #tpu.memory_space<vmem>>, vector<1x128xf32>
    %6 = vector.broadcast %5 : vector<1x128xf32> to vector<64x128xf32>
    %7 = arith.mulf %4, %6 : vector<64x128xf32>
    %c1 = arith.constant 1 : index
    %c0_6 = arith.constant 0 : index
    %8 = vector.load %arg5[%c1, %c0_6] : memref<8x128xf32, #tpu.memory_space<vmem>>, vector<1x128xf32>
    %9 = vector.broadcast %8 : vector<1x128xf32> to vector<64x128xf32>
    %10 = arith.addf %7, %9 : vector<64x128xf32>
    %c0_7 = arith.constant 0 : index
    %c0_8 = arith.constant 0 : index
    %11 = vector.load %arg9[%c0_7, %c0_8] : memref<64x128xf32, #tpu.memory_space<vmem>>, vector<64x128xf32>
    tpu.vector_store %arg9[%c0_7, %c0_8], %10 {strides = array<i32>} : memref<64x128xf32, #tpu.memory_space<vmem>>, vector<64x128xf32>,
    %c0_9 = arith.constant 0 : index
    %c0_10 = arith.constant 0 : index
    %12 = tpu.strided_load %arg9[%c0_9, %c0_10] {strides = array<i32: 2, 1>} : memref<64x128xf32, #tpu.memory_space<vmem>>, vector<32x128xf32>
    %c1_11 = arith.constant 1 : index
    %c0_12 = arith.constant 0 : index
    %13 = tpu.strided_load %arg9[%c1_11, %c0_12] {strides = array<i32: 2, 1>} : memref<64x128xf32, #tpu.memory_space<vmem>>, vector<32x128xf32>
    %14 = arith.maximumf %12, %13 : vector<32x128xf32>
    %c0_13 = arith.constant 0 : index
    %c0_14 = arith.constant 0 : index
    %15 = vector.load %arg10[%c0_13, %c0_14] : memref<40x128xf32, #tpu.memory_space<vmem>>, vector<32x128xf32>
    tpu.vector_store %arg10[%c0_13, %c0_14], %14 {strides = array<i32>} : memref<40x128xf32, #tpu.memory_space<vmem>>, vector<32x128xf32>,
    %c0_15 = arith.constant 0 : index
    %c0_16 = arith.constant 0 : index
    %16 = vector.load %arg10[%c0_15, %c0_16] : memref<40x128xf32, #tpu.memory_space<vmem>>, vector<32x128xf32>
    %c1_17 = arith.constant 1 : index
    %c0_18 = arith.constant 0 : index
    %17 = vector.load %arg10[%c1_17, %c0_18] : memref<40x128xf32, #tpu.memory_space<vmem>>, vector<32x128xf32>
    %c2 = arith.constant 2 : index
    %c0_19 = arith.constant 0 : index
    %18 = vector.load %arg10[%c2, %c0_19] : memref<40x128xf32, #tpu.memory_space<vmem>>, vector<32x128xf32>
    %c3 = arith.constant 3 : index
    %c0_20 = arith.constant 0 : index
    %19 = vector.load %arg10[%c3, %c0_20] : memref<40x128xf32, #tpu.memory_space<vmem>>, vector<32x128xf32>
    %20 = tpu.concatenate %16, %17, %18, %19 in 1 : vector<32x128xf32>, vector<32x128xf32>, vector<32x128xf32>, vector<32x128xf32> -> vector<32x512xf32>
    %21 = arith.truncf %20 : vector<32x512xf32> to vector<32x512xbf16>
    %c0_21 = arith.constant 0 : index
    %c0_22 = arith.constant 0 : index
    %22 = vector.load %arg3[%c0_21, %c0_22] : memref<512x128xbf16, #tpu.memory_space<vmem>>, vector<512x128xbf16>
    %cst_23 = arith.constant dense<0.000000e+00> : vector<32x128xf32>
    %23 = tpu.matmul %21, %22, %cst_23 {dimension_numbers = #tpu.dot_dimension_numbers<[1], [0], [0], [1], [0, 0, 1, 1], [], []>} : vector<32x512xbf16>, vector<512x128xbf16>, vector<32x128xf32> -> vector<32x128xf32>
    %cst_24 = arith.constant 0.000000e+00 : f32
    %24 = vector.broadcast %cst_24 : f32 to vector<32x128xf32>
    %25 = arith.maximumf %23, %24 : vector<32x128xf32>
    %c0_25 = arith.constant 0 : index
    %c0_26 = arith.constant 0 : index
    %26 = vector.load %arg11[%c0_25, %c0_26] : memref<40x128xf32, #tpu.memory_space<vmem>>, vector<32x128xf32>
    tpu.vector_store %arg11[%c0_25, %c0_26], %25 {strides = array<i32>} : memref<40x128xf32, #tpu.memory_space<vmem>>, vector<32x128xf32>,
    %c0_27 = arith.constant 0 : index
    %c0_28 = arith.constant 0 : index
    %27 = vector.load %arg11[%c0_27, %c0_28] : memref<40x128xf32, #tpu.memory_space<vmem>>, vector<32x128xf32>
    %c1_29 = arith.constant 1 : index
    %c0_30 = arith.constant 0 : index
    %28 = vector.load %arg11[%c1_29, %c0_30] : memref<40x128xf32, #tpu.memory_space<vmem>>, vector<32x128xf32>
    %c2_31 = arith.constant 2 : index
    %c0_32 = arith.constant 0 : index
    %29 = vector.load %arg11[%c2_31, %c0_32] : memref<40x128xf32, #tpu.memory_space<vmem>>, vector<32x128xf32>
    %c3_33 = arith.constant 3 : index
    %c0_34 = arith.constant 0 : index
    %30 = vector.load %arg11[%c3_33, %c0_34] : memref<40x128xf32, #tpu.memory_space<vmem>>, vector<32x128xf32>
    %c4 = arith.constant 4 : index
    %c0_35 = arith.constant 0 : index
    %31 = vector.load %arg11[%c4, %c0_35] : memref<40x128xf32, #tpu.memory_space<vmem>>, vector<32x128xf32>
    %c5 = arith.constant 5 : index
    %c0_36 = arith.constant 0 : index
    %32 = vector.load %arg11[%c5, %c0_36] : memref<40x128xf32, #tpu.memory_space<vmem>>, vector<32x128xf32>
    %c6 = arith.constant 6 : index
    %c0_37 = arith.constant 0 : index
    %33 = vector.load %arg11[%c6, %c0_37] : memref<40x128xf32, #tpu.memory_space<vmem>>, vector<32x128xf32>
    %c7 = arith.constant 7 : index
    %c0_38 = arith.constant 0 : index
    %34 = vector.load %arg11[%c7, %c0_38] : memref<40x128xf32, #tpu.memory_space<vmem>>, vector<32x128xf32>
    %35 = tpu.concatenate %27, %28, %29, %30, %31, %32, %33, %34 in 1 : vector<32x128xf32>, vector<32x128xf32>, vector<32x128xf32>, vector<32x128xf32>, vector<32x128xf32>, vector<32x128xf32>, vector<32x128xf32>, vector<32x128xf32> -> vector<32x1024xf32>
    %36 = arith.truncf %35 : vector<32x1024xf32> to vector<32x1024xbf16>
    %c0_39 = arith.constant 0 : index
    %c0_40 = arith.constant 0 : index
    %37 = vector.load %arg4[%c0_39, %c0_40] : memref<1024x128xbf16, #tpu.memory_space<vmem>>, vector<1024x128xbf16>
    %cst_41 = arith.constant dense<0.000000e+00> : vector<32x128xf32>
    %38 = tpu.matmul %36, %37, %cst_41 {dimension_numbers = #tpu.dot_dimension_numbers<[1], [0], [0], [1], [0, 0, 1, 1], [], []>} : vector<32x1024xbf16>, vector<1024x128xbf16>, vector<32x128xf32> -> vector<32x128xf32>
    %c4_42 = arith.constant 4 : index
    %c0_43 = arith.constant 0 : index
    %39 = vector.load %arg5[%c4_42, %c0_43] : memref<8x128xf32, #tpu.memory_space<vmem>>, vector<1x128xf32>
    %40 = vector.broadcast %39 : vector<1x128xf32> to vector<32x128xf32>
    %41 = arith.addf %38, %40 : vector<32x128xf32>
    %cst_44 = arith.constant 0.000000e+00 : f32
    %42 = vector.broadcast %cst_44 : f32 to vector<32x128xf32>
    %43 = arith.maximumf %41, %42 : vector<32x128xf32>
    %c2_45 = arith.constant 2 : index
    %c0_46 = arith.constant 0 : index
    %44 = vector.load %arg5[%c2_45, %c0_46] : memref<8x128xf32, #tpu.memory_space<vmem>>, vector<1x128xf32>
    %45 = vector.broadcast %44 : vector<1x128xf32> to vector<32x128xf32>
    %46 = arith.mulf %43, %45 : vector<32x128xf32>
    %c3_47 = arith.constant 3 : index
    %c0_48 = arith.constant 0 : index
    %47 = vector.load %arg5[%c3_47, %c0_48] : memref<8x128xf32, #tpu.memory_space<vmem>>, vector<1x128xf32>
    %48 = vector.broadcast %47 : vector<1x128xf32> to vector<32x128xf32>
    %49 = arith.addf %46, %48 : vector<32x128xf32>
    %50 = vector.shape_cast %49 : vector<32x128xf32> to vector<2x16x128xf32>
    %51 = tpu.iota {dimensions = array<i32: 1>} : vector<2x16x1xi32>
    %c6_i32 = arith.constant 6 : i32
    %52 = vector.broadcast %c6_i32 : i32 to vector<2x16x1xi32>
    %53 = arith.cmpi slt, %51, %52 : vector<2x16x1xi32>
    %cst_49 = arith.constant 0xFF800000 : f32
    %54 = vector.shape_cast %53 : vector<2x16x1xi1> to vector<2x16x1xi1>
    %55 = vector.broadcast %54 : vector<2x16x1xi1> to vector<2x16x128xi1>
    %56 = vector.broadcast %cst_49 : f32 to vector<2x16x128xf32>
    %57 = arith.select %55, %50, %56 : vector<2x16x128xi1>, vector<2x16x128xf32>
    %cst_50 = arith.constant dense<0xFF800000> : vector<2x128xf32>
    %58 = vector.multi_reduction <maximumf>, %57, %cst_50 [1] : vector<2x16x128xf32> to vector<2x128xf32>
    %59 = arith.truncf %58 : vector<2x128xf32> to vector<2x128xbf16>
    %c0_51 = arith.constant 0 : index
    %c0_52 = arith.constant 0 : index
    %60 = vector.load %arg6[%c0_51, %c0_52] : memref<128x128xbf16, #tpu.memory_space<vmem>>, vector<128x128xbf16>
    %cst_53 = arith.constant dense<0.000000e+00> : vector<2x128xf32>
    %61 = tpu.matmul %59, %60, %cst_53 {dimension_numbers = #tpu.dot_dimension_numbers<[1], [0], [0], [1], [0, 0, 1, 1], [], []>} : vector<2x128xbf16>, vector<128x128xbf16>, vector<2x128xf32> -> vector<2x128xf32>
    %c0_54 = arith.constant 0 : index
    %c0_55 = arith.constant 0 : index
    %62 = vector.load %arg7[%c0_54, %c0_55] : memref<1x128xf32, #tpu.memory_space<vmem>>, vector<1x128xf32>
    %63 = vector.broadcast %62 : vector<1x128xf32> to vector<2x128xf32>
    %64 = arith.addf %61, %63 : vector<2x128xf32>
    %c0_56 = arith.constant 0 : index
    %c0_57 = arith.constant 0 : index
    %c0_58 = arith.constant 0 : index
    %65 = vector.load %arg8[%c0_56, %c0_57, %c0_58] : memref<1x2x128xf32, #tpu.memory_space<vmem>>, vector<1x2x128xf32>
    %66 = vector.shape_cast %65 : vector<1x2x128xf32> to vector<2x128xf32>
    %67 = vector.shape_cast %64 : vector<2x128xf32> to vector<1x2x128xf32>
    tpu.vector_store %arg8[%c0_56, %c0_57, %c0_58], %67 {strides = array<i32>} : memref<1x2x128xf32, #tpu.memory_space<vmem>>, vector<1x2x128xf32>,
    return
  }
  func.func @transform_0(%arg0: i32) -> (i32, i32) {
    %c0_i32 = arith.constant 0 : i32
    %c0_i32_0 = arith.constant 0 : i32
    return %arg0, %c0_i32 : i32, i32
  }
  func.func @transform_1(%arg0: i32) -> (i32, i32) {
    %c0_i32 = arith.constant 0 : i32
    %c0_i32_0 = arith.constant 0 : i32
    %c0_i32_1 = arith.constant 0 : i32
    return %c0_i32, %c0_i32_0 : i32, i32
  }
  func.func @transform_2(%arg0: i32) -> (i32, i32) {
    %c0_i32 = arith.constant 0 : i32
    %c0_i32_0 = arith.constant 0 : i32
    %c0_i32_1 = arith.constant 0 : i32
    return %c0_i32, %c0_i32_0 : i32, i32
  }
  func.func @transform_3(%arg0: i32) -> (i32, i32) {
    %c0_i32 = arith.constant 0 : i32
    %c0_i32_0 = arith.constant 0 : i32
    %c0_i32_1 = arith.constant 0 : i32
    return %c0_i32, %c0_i32_0 : i32, i32
  }
  func.func @transform_4(%arg0: i32) -> (i32, i32) {
    %c0_i32 = arith.constant 0 : i32
    %c0_i32_0 = arith.constant 0 : i32
    %c0_i32_1 = arith.constant 0 : i32
    return %c0_i32, %c0_i32_0 : i32, i32
  }
  func.func @transform_5(%arg0: i32) -> (i32, i32) {
    %c0_i32 = arith.constant 0 : i32
    %c0_i32_0 = arith.constant 0 : i32
    %c0_i32_1 = arith.constant 0 : i32
    return %c0_i32, %c0_i32_0 : i32, i32
  }
  func.func @transform_6(%arg0: i32) -> (i32, i32) {
    %c0_i32 = arith.constant 0 : i32
    %c0_i32_0 = arith.constant 0 : i32
    %c0_i32_1 = arith.constant 0 : i32
    return %c0_i32, %c0_i32_0 : i32, i32
  }
  func.func @transform_7(%arg0: i32) -> (i32, i32, i32) {
    %c0_i32 = arith.constant 0 : i32
    %c0_i32_0 = arith.constant 0 : i32
    %c0_i32_1 = arith.constant 0 : i32
    return %arg0, %c0_i32, %c0_i32_0 : i32, i32, i32
  }
}

</mosaic_0001>

<llo_original>
// kernel: pitom_forward.1
$region0: #{pitom_forward.1}
  #allocation0 [shape = 'u32[]', space=smem, size = 0x4, offset = 0x4, fixed_abs, tag = 'smem constant byte address 0x4 - core index']
  #allocation1 [shape = 'u32[144,128]{1,0:T(1,128)}', space=vmem, size = 0x12000, scoped, tag = 'internal scratch']
  #allocation2 [shape = 'f32[64,128]{1,0:T(8,128)}', space=vmem, size = 0x8000, scoped, tag = 'scratch operand']
  #allocation3 [shape = 'f32[40,128]{1,0:T(8,128)}', space=vmem, size = 0x5000, scoped, tag = 'scratch operand']
  #allocation4 [shape = 'f32[40,128]{1,0:T(8,128)}', space=vmem, size = 0x5000, scoped, tag = 'scratch operand']
  %s0 = inlined_call_operand.vmem [shape: bf16[128,72], index: 0, kind: input, shape index: {}]
  %s1 = inlined_call_operand.vmem [shape: bf16[72,128], index: 1, kind: input, shape index: {}]
  %s2 = inlined_call_operand.vmem [shape: bf16[512,128], index: 2, kind: input, shape index: {}]
  %s3 = inlined_call_operand.vmem [shape: bf16[1024,128], index: 3, kind: input, shape index: {}]
  %s4 = inlined_call_operand.vmem [shape: f32[8,128], index: 4, kind: input, shape index: {}]
  %s5 = inlined_call_operand.vmem [shape: bf16[128,128], index: 5, kind: input, shape index: {}]
  %s6 = inlined_call_operand.vmem [shape: f32[1,128], index: 6, kind: input, shape index: {}]
  %s7 = inlined_call_operand.hbm [shape: f32[2,2,128], index: 7, kind: output, shape index: {}]
  %s8 = sld [smem:[#allocation0]]
  $region61: #{pitom_forward.1} parent=0
    _
  %s10 = ssub.s32 1, %s8
  %s11 = scalar_select 0, %s10, %s8
  $region1: #{pitom_forward.1} parent=0
    #allocation5 [shape = 'u8[2048]{0}', space=vmem, size = 0x800, scoped, tag = 'output window, operand 0']
    #allocation6 [shape = 's32[2]{0}', space=sflag, size = 0x8, scoped, tag = 'scoped memory for pitom_forward.1']
    %12 = vsyncpa [#allocation6], 0
    %s13 = scalar_lea.sflag [#allocation6], 1
    %14 = vsyncpa %s13, 0
    loop: start=0, step=1, limit=4
    $region2: #{pitom_forward.1} parent=1 // loop_pre_header
      _
    $region3: #{pitom_forward.1} parent=1 // loop_header
      %s16 = sphi 0, %s20
      %p17 = scmp.ge.s32.totalorder %s16, 4
      %s26 = sphi 0, %s28
      %s29 = sphi 0, %s26
      %s30 = sphi 0, %s29
      %s46 = sphi 0, %s30
      %s50 = sphi 0, %s50
      %s52 = sphi 0, %s50
      %s53 = sphi 0, %s52
      %s67 = sphi 0, %s53
      %s71 = sphi 0, %s71
      %s73 = sphi 0, %s71
      %s74 = sphi 0, %s73
      %s88 = sphi 0, %s74
      %s92 = sphi 0, %s92
      %s94 = sphi 0, %s92
      %s95 = sphi 0, %s94
      %s109 = sphi 0, %s95
      %s113 = sphi 0, %s113
      %s115 = sphi 0, %s113
      %s116 = sphi 0, %s115
      %s130 = sphi 0, %s116
      %s134 = sphi 0, %s134
      %s136 = sphi 0, %s134
      %s137 = sphi 0, %s136
      %s151 = sphi 0, %s137
      %s155 = sphi 0, %s155
      %s157 = sphi 0, %s155
      %s158 = sphi 0, %s157
      %s172 = sphi 0, %s158
      %s178 = sphi 0, %s180
      %s181 = sphi 0, %s178
      %s182 = sphi 0, %s181
      %s198 = sphi 0, %s182
    $region4: #{pitom_forward.1} parent=1 // loop_header_branch
      %19 = sbr.rel (%p17) target = $region8
    $region5: #{pitom_forward.1} parent=1 // loop_body
      %s21 = ssub.s32 %s16, 1
      %s22 = ssub.s32 %s16, 2
      %s23 = sadd.s32 %s16, 1
      %s24 = ssub.s32 %s16, %s23
      %p25 = scmp.eq.s32.totalorder %s24, 0
      %s27 = sadd.s32 %s26, 1
      %s28 = scalar_select %p25, %s26, %s27
      %p31 = pneg %p25
      %p32 = scmp.eq.s32.totalorder %s16, 1
      %p33 = por %p31, %p32
      %p34 = scmp.ne.s32.totalorder %s26, %s29
      %p35 = scmp.eq.s32.totalorder %s16, 0
      %p36 = por %p34, %p35
      %p37 = scmp.ne.s32.totalorder %s26, %s29
      %p38 = scmp.eq.s32.totalorder %s21, 1
      %p39 = por %p37, %p38
      %p40 = scmp.ne.s32.totalorder %s29, %s30
      %p41 = scmp.eq.s32.totalorder %s21, 0
      %p42 = por %p40, %p41
      %p43 = scmp.ne.s32.totalorder %s29, %s30
      %p44 = scmp.eq.s32.totalorder %s22, 1
      %p45 = por %p43, %p44
      %p47 = scmp.ne.s32.totalorder %s30, %s46
      %p48 = scmp.eq.s32.totalorder %s22, 0
      %p49 = por %p47, %p48
      %s51 = sadd.s32 %s50, 1
      %p54 = scmp.eq.s32.totalorder %s16, 1
      %p55 = scmp.ne.s32.totalorder %s50, %s52
      %p56 = scmp.eq.s32.totalorder %s16, 0
      %p57 = por %p55, %p56
      %p58 = scmp.ne.s32.totalorder %s50, %s52
      %p59 = scmp.eq.s32.totalorder %s21, 1
      %p60 = por %p58, %p59
      %p61 = scmp.ne.s32.totalorder %s52, %s53
      %p62 = scmp.eq.s32.totalorder %s21, 0
      %p63 = por %p61, %p62
      %p64 = scmp.ne.s32.totalorder %s52, %s53
      %p65 = scmp.eq.s32.totalorder %s22, 1
      %p66 = por %p64, %p65
      %p68 = scmp.ne.s32.totalorder %s53, %s67
      %p69 = scmp.eq.s32.totalorder %s22, 0
      %p70 = por %p68, %p69
      %s72 = sadd.s32 %s71, 1
      %p75 = scmp.eq.s32.totalorder %s16, 1
      %p76 = scmp.ne.s32.totalorder %s71, %s73
      %p77 = scmp.eq.s32.totalorder %s16, 0
      %p78 = por %p76, %p77
      %p79 = scmp.ne.s32.totalorder %s71, %s73
      %p80 = scmp.eq.s32.totalorder %s21, 1
      %p81 = por %p79, %p80
      %p82 = scmp.ne.s32.totalorder %s73, %s74
      %p83 = scmp.eq.s32.totalorder %s21, 0
      %p84 = por %p82, %p83
      %p85 = scmp.ne.s32.totalorder %s73, %s74
      %p86 = scmp.eq.s32.totalorder %s22, 1
      %p87 = por %p85, %p86
      %p89 = scmp.ne.s32.totalorder %s74, %s88
      %p90 = scmp.eq.s32.totalorder %s22, 0
      %p91 = por %p89, %p90
      %s93 = sadd.s32 %s92, 1
      %p96 = scmp.eq.s32.totalorder %s16, 1
      %p97 = scmp.ne.s32.totalorder %s92, %s94
      %p98 = scmp.eq.s32.totalorder %s16, 0
      %p99 = por %p97, %p98
      %p100 = scmp.ne.s32.totalorder %s92, %s94
      %p101 = scmp.eq.s32.totalorder %s21, 1
      %p102 = por %p100, %p101
      %p103 = scmp.ne.s32.totalorder %s94, %s95
      %p104 = scmp.eq.s32.totalorder %s21, 0
      %p105 = por %p103, %p104
      %p106 = scmp.ne.s32.totalorder %s94, %s95
      %p107 = scmp.eq.s32.totalorder %s22, 1
      %p108 = por %p106, %p107
      %p110 = scmp.ne.s32.totalorder %s95, %s109
      %p111 = scmp.eq.s32.totalorder %s22, 0
      %p112 = por %p110, %p111
      %s114 = sadd.s32 %s113, 1
      %p117 = scmp.eq.s32.totalorder %s16, 1
      %p118 = scmp.ne.s32.totalorder %s113, %s115
      %p119 = scmp.eq.s32.totalorder %s16, 0
      %p120 = por %p118, %p119
      %p121 = scmp.ne.s32.totalorder %s113, %s115
      %p122 = scmp.eq.s32.totalorder %s21, 1
      %p123 = por %p121, %p122
      %p124 = scmp.ne.s32.totalorder %s115, %s116
      %p125 = scmp.eq.s32.totalorder %s21, 0
      %p126 = por %p124, %p125
      %p127 = scmp.ne.s32.totalorder %s115, %s116
      %p128 = scmp.eq.s32.totalorder %s22, 1
      %p129 = por %p127, %p128
      %p131 = scmp.ne.s32.totalorder %s116, %s130
      %p132 = scmp.eq.s32.totalorder %s22, 0
      %p133 = por %p131, %p132
      %s135 = sadd.s32 %s134, 1
      %p138 = scmp.eq.s32.totalorder %s16, 1
      %p139 = scmp.ne.s32.totalorder %s134, %s136
      %p140 = scmp.eq.s32.totalorder %s16, 0
      %p141 = por %p139, %p140
      %p142 = scmp.ne.s32.totalorder %s134, %s136
      %p143 = scmp.eq.s32.totalorder %s21, 1
      %p144 = por %p142, %p143
      %p145 = scmp.ne.s32.totalorder %s136, %s137
      %p146 = scmp.eq.s32.totalorder %s21, 0
      %p147 = por %p145, %p146
      %p148 = scmp.ne.s32.totalorder %s136, %s137
      %p149 = scmp.eq.s32.totalorder %s22, 1
      %p150 = por %p148, %p149
      %p152 = scmp.ne.s32.totalorder %s137, %s151
      %p153 = scmp.eq.s32.totalorder %s22, 0
      %p154 = por %p152, %p153
      %s156 = sadd.s32 %s155, 1
      %p159 = scmp.eq.s32.totalorder %s16, 1
      %p160 = scmp.ne.s32.totalorder %s155, %s157
      %p161 = scmp.eq.s32.totalorder %s16, 0
      %p162 = por %p160, %p161
      %p163 = scmp.ne.s32.totalorder %s155, %s157
      %p164 = scmp.eq.s32.totalorder %s21, 1
      %p165 = por %p163, %p164
      %p166 = scmp.ne.s32.totalorder %s157, %s158
      %p167 = scmp.eq.s32.totalorder %s21, 0
      %p168 = por %p166, %p167
      %p169 = scmp.ne.s32.totalorder %s157, %s158
      %p170 = scmp.eq.s32.totalorder %s22, 1
      %p171 = por %p169, %p170
      %p173 = scmp.ne.s32.totalorder %s158, %s172
      %p174 = scmp.eq.s32.totalorder %s22, 0
      %p175 = por %p173, %p174
      %s176 = ssub.s32 %s16, %s23
      %p177 = scmp.eq.s32.totalorder %s176, 0
      %s179 = sadd.s32 %s178, 1
      %s180 = scalar_select %p177, %s178, %s179
      %p183 = pneg %p177
      %p184 = scmp.eq.s32.totalorder %s16, 1
      %p185 = por %p183, %p184
      %p186 = scmp.ne.s32.totalorder %s178, %s181
      %p187 = scmp.eq.s32.totalorder %s16, 0
      %p188 = por %p186, %p187
      %p189 = scmp.ne.s32.totalorder %s178, %s181
      %p190 = scmp.eq.s32.totalorder %s21, 1
      %p191 = por %p189, %p190
      %p192 = scmp.ne.s32.totalorder %s181, %s182
      %p193 = scmp.eq.s32.totalorder %s21, 0
      %p194 = por %p192, %p193
      %p195 = scmp.ne.s32.totalorder %s181, %s182
      %p196 = scmp.eq.s32.totalorder %s22, 1
      %p197 = por %p195, %p196
      %p199 = scmp.ne.s32.totalorder %s182, %s198
      %p200 = scmp.eq.s32.totalorder %s22, 0
      %p201 = por %p199, %p200
      %p202 = scmp.le.s32.totalorder 1, %s16
      %p203 = scmp.lt.s32.totalorder %s16, 3
      %p204 = pnand %p202, %p203
      %p205 = pneg %p204
      // Predicated region
      $region9: #{pitom_forward.1} parent=5 // pred_check
        _
      $region10: #{pitom_forward.1} parent=5 // pred_check_branch
        %207 = sbr.rel (%p204) target = $region12
      $region11: #{pitom_forward.1} parent=5 // pred_region
        %s208 = ssub.s32 %s16, 1
        // Predicated region
        $region13: #{pitom_forward.1} parent=11 // pred_check
          %p209 = pneg %p63
        $region14: #{pitom_forward.1} parent=11 // pred_check_branch
          %211 = sbr.rel (%p209) target = $region16
        $region15: #{pitom_forward.1} parent=11 // pred_region
          _
        $region16: #{pitom_forward.1} parent=11 // pred_fallthru
          _
        // Predicated region
        $region17: #{pitom_forward.1} parent=11 // pred_check
          %p212 = pneg %p84
        $region18: #{pitom_forward.1} parent=11 // pred_check_branch
          %214 = sbr.rel (%p212) target = $region20
        $region19: #{pitom_forward.1} parent=11 // pred_region
          _
        $region20: #{pitom_forward.1} parent=11 // pred_fallthru
          _
        // Predicated region
        $region21: #{pitom_forward.1} parent=11 // pred_check
          %p215 = pneg %p105
        $region22: #{pitom_forward.1} parent=11 // pred_check_branch
          %217 = sbr.rel (%p215) target = $region24
        $region23: #{pitom_forward.1} parent=11 // pred_region
          _
        $region24: #{pitom_forward.1} parent=11 // pred_fallthru
          _
        // Predicated region
        $region25: #{pitom_forward.1} parent=11 // pred_check
          %p218 = pneg %p126
        $region26: #{pitom_forward.1} parent=11 // pred_check_branch
          %220 = sbr.rel (%p218) target = $region28
        $region27: #{pitom_forward.1} parent=11 // pred_region
          _
        $region28: #{pitom_forward.1} parent=11 // pred_fallthru
          _
        // Predicated region
        $region29: #{pitom_forward.1} parent=11 // pred_check
          %p221 = pneg %p147
        $region30: #{pitom_forward.1} parent=11 // pred_check_branch
          %223 = sbr.rel (%p221) target = $region32
        $region31: #{pitom_forward.1} parent=11 // pred_region
          _
        $region32: #{pitom_forward.1} parent=11 // pred_fallthru
          _
        // Predicated region
        $region33: #{pitom_forward.1} parent=11 // pred_check
          %p224 = pneg %p168
        $region34: #{pitom_forward.1} parent=11 // pred_check_branch
          %226 = sbr.rel (%p224) target = $region36
        $region35: #{pitom_forward.1} parent=11 // pred_region
          _
        $region36: #{pitom_forward.1} parent=11 // pred_fallthru
          _
      $region12: #{pitom_forward.1} parent=5 // pred_fallthru
        _
      %p227 = scmp.lt.s32.totalorder %s16, 2
      // Predicated region
      $region37: #{pitom_forward.1} parent=5 // pred_check
        %p228 = pneg %p227
      $region38: #{pitom_forward.1} parent=5 // pred_check_branch
        %230 = sbr.rel (%p228) target = $region40
      $region39: #{pitom_forward.1} parent=5 // pred_region
        // Predicated region
        $region41: #{pitom_forward.1} parent=39 // pred_check
          %p231 = pneg %p36
        $region42: #{pitom_forward.1} parent=39 // pred_check_branch
          %233 = sbr.rel (%p231) target = $region44
        $region43: #{pitom_forward.1} parent=39 // pred_region
          %s234 = smul.u32 8, %s16
          %p235 = scmp.lt.s32.totalorder %s234, 15
          %s236 = scalar_select %p235, %s234, 15
          %s237 = smul.addr %s236, 4
          %s238 = scalar_lea.vmem %s0, %s237
          %s239 = smul.u32 8, %s16
        $region44: #{pitom_forward.1} parent=39 // pred_fallthru
          _
      $region40: #{pitom_forward.1} parent=5 // pred_fallthru
        _
      %p240 = scmp.le.s32.totalorder 1, %s16
      %p241 = scmp.lt.s32.totalorder %s16, 3
      %p242 = pnand %p240, %p241
      %p243 = pneg %p242
      // Predicated region
      $region45: #{pitom_forward.1} parent=5 // pred_check
        _
      $region46: #{pitom_forward.1} parent=5 // pred_check_branch
        %245 = sbr.rel (%p242) target = $region48
      $region47: #{pitom_forward.1} parent=5 // pred_region
        %s246 = ssub.s32 %s16, 1
        %s247 = smul.u32 8, %s21
        %p248 = scmp.lt.s32.totalorder %s247, 15
        %s249 = scalar_select %p248, %s247, 15
        %s250 = smul.addr %s249, 4
        %s251 = scalar_lea.vmem %s0, %s250
        %p252 = pneg %p42
        %p253 = pneg %p39
        %p254 = pneg %p63
        %p255 = pneg %p60
        %p256 = pneg %p84
        %p257 = pneg %p81
        %p258 = pneg %p105
        %p259 = pneg %p102
        %p260 = pneg %p126
        %p261 = pneg %p123
        %p262 = pneg %p147
        %p263 = pneg %p144
        %p264 = pneg %p168
        %p265 = pneg %p165
        %p266 = pneg %p194
        %p267 = pneg %p191
        %s268 = sand.u32 %s181, 1
        %s269 = scalar_lea.sflag [#allocation6], %s268
        %s270 = sand.u32 %s181, 1
        %s271 = smul.addr %s270, 2
        %s272 = scalar_lea.vmem [#allocation5], %s271
        %s273 = smul.u32 8, %s21
        %p274 = scmp.lt.s32.totalorder %s273, 15
        %s275 = scalar_select %p274, %s273, 15
        %s276 = smul.addr %s275, 4
        %s277 = scalar_lea.vmem %s0, %s276
        %s278 = smul.u32 8, %s21
        %v280 = vld [vmem:[%s277] sm:$0xf]
        %v281 = vld [vmem:[%s277 + $0x4] sm:$0xf]
        %v282 = vld [vmem:[%s277 + $0x8] sm:$0xf]
        %v283 = vld [vmem:[%s277 + $0xc] sm:$0xf]
        %v284 = vld [vmem:[%s277 + $0x10] sm:$0xf]
        %v285 = vld [vmem:[%s277 + $0x14] sm:$0xf]
        %v286 = vld [vmem:[%s277 + $0x18] sm:$0xf]
        %v287 = vld [vmem:[%s277 + $0x1c] sm:$0xf]
        %v288 = vld [vmem:[%s1] sm:$0xf]
        %v289 = vld [vmem:[%s1 + $0x4] sm:$0xf]
        %v290 = vld [vmem:[%s1 + $0x8] sm:$0xf]
        %v291 = vld [vmem:[%s1 + $0xc] sm:$0xf]
        %v292 = vld [vmem:[%s1 + $0x10] sm:$0xf]
        %v293 = vld [vmem:[%s1 + $0x14] sm:$0xf]
        %v294 = vld [vmem:[%s1 + $0x18] sm:$0xf]
        %v295 = vld [vmem:[%s1 + $0x1c] sm:$0xf]
        %v296 = vld [vmem:[%s1 + $0x20] sm:$0xf]
        %v305 = vunpack.c.l.b16 %v280
        %v306 = vunpack.c.l.b16 %v281
        %v307 = vunpack.c.l.b16 %v282
        %v308 = vunpack.c.l.b16 %v283
        %v309 = vunpack.c.l.b16 %v284
        %v310 = vunpack.c.l.b16 %v285
        %v311 = vunpack.c.l.b16 %v286
        %v312 = vunpack.c.l.b16 %v287
        %v313 = vpack.c.b16 %v306, %v305
        %v314 = vpack.c.b16 %v308, %v307
        %v315 = vpack.c.b16 %v310, %v309
        %v316 = vpack.c.b16 %v312, %v311
        %v326 = vunpack.c.l.b16 %v288
        %v327 = vunpack.c.l.b16 %v289
        %v328 = vunpack.c.l.b16 %v290
        %v329 = vunpack.c.l.b16 %v291
        %v330 = vunpack.c.l.b16 %v292
        %v331 = vunpack.c.l.b16 %v293
        %v332 = vunpack.c.l.b16 %v294
        %v333 = vunpack.c.l.b16 %v295
        %v334 = vunpack.c.l.b16 %v296
        %v335 = vpack.c.b16 %v327, %v326
        %v336 = vpack.c.b16 %v329, %v328
        %v337 = vpack.c.b16 %v331, %v330
        %v338 = vpack.c.b16 %v333, %v332
        %v339 = vpack.c.b16 %v334, %v334
        %vm344 = vcmask 588800
        %v346 = vsel %vm344, %v313, 0
        %v349 = vsel %vm344, %v314, 0
        %v352 = vsel %vm344, %v315, 0
        %v355 = vsel %vm344, %v316, 0
        %vm357 = vcmask 1043456
        %v359 = vsel %vm357, %v339, 0
        %361 = vmatprep.subr.bf16.mxu0 0
        %362 = vmatpush1.bf16.msra.mxu0 %v335
        %363 = vmatprep.subr.bf16.mxu0 0
        %364 = vmatpush1.bf16.msra.mxu0 %v336
        %365 = vmatprep.subr.bf16.mxu0 0
        %366 = vmatpush1.bf16.msra.mxu0 %v337
        %367 = vmatprep.subr.bf16.mxu0 0
        %368 = vmatpush1.bf16.msra.mxu0 %v338
        %369 = vmatprep.subr.bf16.mxu0 0
        %370 = vmatpush1.bf16.msra.mxu0 %v359
        %371 = vmatprep.subr.bf16.mxu0 0
        %372 = vmatpush1.bf16.msra.mxu0 0
        %373 = vmatprep.subr.bf16.mxu0 0
        %374 = vmatpush1.bf16.msra.mxu0 0
        %375 = vmatprep.subr.bf16.mxu0 0
        %376 = vmatpush1.bf16.msra.mxu0 0
        %377 = vmatprep.subr.bf16.mxu0 0
        %378 = vmatpush1.bf16.msra.mxu0 0
        %379 = vmatprep.subr.bf16.mxu0 0
        %380 = vmatpush1.bf16.msra.mxu0 0
        %381 = vmatprep.subr.bf16.mxu0 0
        %382 = vmatpush1.bf16.msra.mxu0 0
        %383 = vmatprep.subr.bf16.mxu0 0
        %384 = vmatpush1.bf16.msra.mxu0 0
        %385 = vmatprep.subr.bf16.mxu0 0
        %386 = vmatpush1.bf16.msra.mxu0 0
        %387 = vmatprep.subr.bf16.mxu0 0
        %388 = vmatpush1.bf16.msra.mxu0 0
        %389 = vmatprep.subr.bf16.mxu0 0
        %390 = vmatpush1.bf16.msra.mxu0 0
        %391 = vmatprep.subr.bf16.mxu0 0
        %392 = vmatpush1.bf16.msra.mxu0 0
        %393 = vmatprep.mubr.bf16.mxu0 0
        %394 = vmatmul.mubr.bf16.gmra.mrb[0].mxu0 %v346
        %v395 = vpop.f32.mrb[0].mxu0
        %v396 = vadd.f32 0.0, %v395
        %v397 = vpop.f32.mrb[0].mxu0
        %v398 = vpop.f32.mrb[0].mxu0
        %v399 = vadd.f32 0.0, %v398
        %v400 = vpop.f32.mrb[0].mxu0
        %401 = vmatprep.mubr.bf16.mxu0 0
        %402 = vmatmul.mubr.bf16.gmra.mrb[0].mxu0 %v349
        %v403 = vpop.f32.mrb[0].mxu0
        %v404 = vadd.f32 0.0, %v403
        %v405 = vpop.f32.mrb[0].mxu0
        %v406 = vpop.f32.mrb[0].mxu0
        %v407 = vadd.f32 0.0, %v406
        %v408 = vpop.f32.mrb[0].mxu0
        %409 = vmatprep.mubr.bf16.mxu0 0
        %410 = vmatmul.mubr.bf16.gmra.mrb[0].mxu0 %v352
        %v411 = vpop.f32.mrb[0].mxu0
        %v412 = vadd.f32 0.0, %v411
        %v413 = vpop.f32.mrb[0].mxu0
        %v414 = vpop.f32.mrb[0].mxu0
        %v415 = vadd.f32 0.0, %v414
        %v416 = vpop.f32.mrb[0].mxu0
        %417 = vmatprep.mubr.bf16.mxu0 0
        %418 = vmatmul.mubr.bf16.gmra.mrb[0].mxu0 %v355
        %v419 = vpop.f32.mrb[0].mxu0
        %v420 = vadd.f32 0.0, %v419
        %v421 = vpop.f32.mrb[0].mxu0
        %v422 = vpop.f32.mrb[0].mxu0
        %v423 = vadd.f32 0.0, %v422
        %v424 = vpop.f32.mrb[0].mxu0
        %425 = vdwg.mxu0
        %v426 = vmax.f32 %v396, 0.0
        %v427 = vmax.f32 %v399, 0.0
        %v428 = vmax.f32 %v404, 0.0
        %v429 = vmax.f32 %v407, 0.0
        %v430 = vmax.f32 %v412, 0.0
        %v431 = vmax.f32 %v415, 0.0
        %v432 = vmax.f32 %v420, 0.0
        %v433 = vmax.f32 %v423, 0.0
        %v434 = vld [vmem:[%s4] sm:$0x1]
        %v435 = vlaneseq
        %v436 = vshrl.u32 %v435, 7
        %v437 = vsub.s32 0, %v436
        %v438 = vrot.slane %v434, %v437
        %v439 = vmul.f32 %v426, %v438
        %v440 = vmul.f32 %v427, %v438
        %v441 = vmul.f32 %v428, %v438
        %v442 = vmul.f32 %v429, %v438
        %v443 = vmul.f32 %v430, %v438
        %v444 = vmul.f32 %v431, %v438
        %v445 = vmul.f32 %v432, %v438
        %v446 = vmul.f32 %v433, %v438
        %v447 = vld [vmem:[%s4 + $0x1] sm:$0x1]
        %v448 = vlaneseq
        %v449 = vshrl.u32 %v448, 7
        %v450 = vsub.s32 0, %v449
        %v451 = vrot.slane %v447, %v450
        %v452 = vadd.f32 %v439, %v451
        %v453 = vadd.f32 %v440, %v451
        %v454 = vadd.f32 %v441, %v451
        %v455 = vadd.f32 %v442, %v451
        %v456 = vadd.f32 %v443, %v451
        %v457 = vadd.f32 %v444, %v451
        %v458 = vadd.f32 %v445, %v451
        %v459 = vadd.f32 %v446, %v451
        %460 = vst [vmem:[#allocation2] sm:$0xff] %v452
        %461 = vst [vmem:[#allocation2 + $0x8] sm:$0xff] %v453
        %462 = vst [vmem:[#allocation2 + $0x10] sm:$0xff] %v454
        %463 = vst [vmem:[#allocation2 + $0x18] sm:$0xff] %v455
        %464 = vst [vmem:[#allocation2 + $0x20] sm:$0xff] %v456
        %465 = vst [vmem:[#allocation2 + $0x28] sm:$0xff] %v457
        %466 = vst [vmem:[#allocation2 + $0x30] sm:$0xff] %v458
        %467 = vst [vmem:[#allocation2 + $0x38] sm:$0xff] %v459
        %v468 = vld [vmem:[#allocation2] ss:$2 sm:$0xff]
        %s469 = scalar_lea.vmem [#allocation2], 16
        %v470 = vld [vmem:[%s469] ss:$2 sm:$0xff]
        %s471 = scalar_lea.vmem [#allocation2], 32
        %v472 = vld [vmem:[%s471] ss:$2 sm:$0xff]
        %s473 = scalar_lea.vmem [#allocation2], 48
        %v474 = vld [vmem:[%s473] ss:$2 sm:$0xff]
        %s475 = scalar_lea.vmem [#allocation2], 1
        %v476 = vld [vmem:[%s475] ss:$2 sm:$0xff]
        %s477 = scalar_lea.vmem [#allocation2], 17
        %v478 = vld [vmem:[%s477] ss:$2 sm:$0xff]
        %s479 = scalar_lea.vmem [#allocation2], 33
        %v480 = vld [vmem:[%s479] ss:$2 sm:$0xff]
        %s481 = scalar_lea.vmem [#allocation2], 49
        %v482 = vld [vmem:[%s481] ss:$2 sm:$0xff]
        %v483 = vmax.f32 %v468, %v476
        %v484 = vmax.f32 %v470, %v478
        %v485 = vmax.f32 %v472, %v480
        %v486 = vmax.f32 %v474, %v482
        %487 = vst [vmem:[#allocation3] sm:$0xff] %v483
        %488 = vst [vmem:[#allocation3 + $0x8] sm:$0xff] %v484
        %489 = vst [vmem:[#allocation3 + $0x10] sm:$0xff] %v485
        %490 = vst [vmem:[#allocation3 + $0x18] sm:$0xff] %v486
        %v491 = vld [vmem:[#allocation3] sm:$0xff]
        %v492 = vld [vmem:[#allocation3 + $0x8] sm:$0xff]
        %v493 = vld [vmem:[#allocation3 + $0x10] sm:$0xff]
        %v494 = vld [vmem:[#allocation3 + $0x18] sm:$0xff]
        %v495 = vld [vmem:[#allocation3 + $0x1] sm:$0xff]
        %v496 = vld [vmem:[#allocation3 + $0x9] sm:$0xff]
        %v497 = vld [vmem:[#allocation3 + $0x11] sm:$0xff]
        %v498 = vld [vmem:[#allocation3 + $0x19] sm:$0xff]
        %v499 = vld [vmem:[#allocation3 + $0x2] sm:$0xff]
        %v500 = vld [vmem:[#allocation3 + $0xa] sm:$0xff]
        %v501 = vld [vmem:[#allocation3 + $0x12] sm:$0xff]
        %v502 = vld [vmem:[#allocation3 + $0x1a] sm:$0xff]
        %v503 = vld [vmem:[#allocation3 + $0x3] sm:$0xff]
        %v504 = vld [vmem:[#allocation3 + $0xb] sm:$0xff]
        %v505 = vld [vmem:[#allocation3 + $0x13] sm:$0xff]
        %v506 = vld [vmem:[#allocation3 + $0x1b] sm:$0xff]
        %v507 = vpack.c.bf16 %v492, %v491
        %v508 = vpack.c.bf16 %v496, %v495
        %v509 = vpack.c.bf16 %v500, %v499
        %v510 = vpack.c.bf16 %v504, %v503
        %v511 = vpack.c.bf16 %v494, %v493
        %v512 = vpack.c.bf16 %v498, %v497
        %v513 = vpack.c.bf16 %v502, %v501
        %v514 = vpack.c.bf16 %v506, %v505
        %v515 = vld [vmem:[%s2] sm:$0xf]
        %v516 = vld [vmem:[%s2 + $0x4] sm:$0xf]
        %v517 = vld [vmem:[%s2 + $0x8] sm:$0xf]
        %v518 = vld [vmem:[%s2 + $0xc] sm:$0xf]
        %v519 = vld [vmem:[%s2 + $0x10] sm:$0xf]
        %v520 = vld [vmem:[%s2 + $0x14] sm:$0xf]
        %v521 = vld [vmem:[%s2 + $0x18] sm:$0xf]
        %v522 = vld [vmem:[%s2 + $0x1c] sm:$0xf]
        %v523 = vld [vmem:[%s2 + $0x20] sm:$0xf]
        %v524 = vld [vmem:[%s2 + $0x24] sm:$0xf]
        %v525 = vld [vmem:[%s2 + $0x28] sm:$0xf]
        %v526 = vld [vmem:[%s2 + $0x2c] sm:$0xf]
        %v527 = vld [vmem:[%s2 + $0x30] sm:$0xf]
        %v528 = vld [vmem:[%s2 + $0x34] sm:$0xf]
        %v529 = vld [vmem:[%s2 + $0x38] sm:$0xf]
        %v530 = vld [vmem:[%s2 + $0x3c] sm:$0xf]
        %v531 = vld [vmem:[%s2 + $0x40] sm:$0xf]
        %v532 = vld [vmem:[%s2 + $0x44] sm:$0xf]
        %v533 = vld [vmem:[%s2 + $0x48] sm:$0xf]
        %v534 = vld [vmem:[%s2 + $0x4c] sm:$0xf]
        %v535 = vld [vmem:[%s2 + $0x50] sm:$0xf]
        %v536 = vld [vmem:[%s2 + $0x54] sm:$0xf]
        %v537 = vld [vmem:[%s2 + $0x58] sm:$0xf]
        %v538 = vld [vmem:[%s2 + $0x5c] sm:$0xf]
        %v539 = vld [vmem:[%s2 + $0x60] sm:$0xf]
        %v540 = vld [vmem:[%s2 + $0x64] sm:$0xf]
        %v541 = vld [vmem:[%s2 + $0x68] sm:$0xf]
        %v542 = vld [vmem:[%s2 + $0x6c] sm:$0xf]
        %v543 = vld [vmem:[%s2 + $0x70] sm:$0xf]
        %v544 = vld [vmem:[%s2 + $0x74] sm:$0xf]
        %v545 = vld [vmem:[%s2 + $0x78] sm:$0xf]
        %v546 = vld [vmem:[%s2 + $0x7c] sm:$0xf]
        %v547 = vld [vmem:[%s2 + $0x80] sm:$0xf]
        %v548 = vld [vmem:[%s2 + $0x84] sm:$0xf]
        %v549 = vld [vmem:[%s2 + $0x88] sm:$0xf]
        %v550 = vld [vmem:[%s2 + $0x8c] sm:$0xf]
        %v551 = vld [vmem:[%s2 + $0x90] sm:$0xf]
        %v552 = vld [vmem:[%s2 + $0x94] sm:$0xf]
        %v553 = vld [vmem:[%s2 + $0x98] sm:$0xf]
        %v554 = vld [vmem:[%s2 + $0x9c] sm:$0xf]
        %v555 = vld [vmem:[%s2 + $0xa0] sm:$0xf]
        %v556 = vld [vmem:[%s2 + $0xa4] sm:$0xf]
        %v557 = vld [vmem:[%s2 + $0xa8] sm:$0xf]
        %v558 = vld [vmem:[%s2 + $0xac] sm:$0xf]
        %v559 = vld [vmem:[%s2 + $0xb0] sm:$0xf]
        %v560 = vld [vmem:[%s2 + $0xb4] sm:$0xf]
        %v561 = vld [vmem:[%s2 + $0xb8] sm:$0xf]
        %v562 = vld [vmem:[%s2 + $0xbc] sm:$0xf]
        %v563 = vld [vmem:[%s2 + $0xc0] sm:$0xf]
        %v564 = vld [vmem:[%s2 + $0xc4] sm:$0xf]
        %v565 = vld [vmem:[%s2 + $0xc8] sm:$0xf]
        %v566 = vld [vmem:[%s2 + $0xcc] sm:$0xf]
        %v567 = vld [vmem:[%s2 + $0xd0] sm:$0xf]
        %v568 = vld [vmem:[%s2 + $0xd4] sm:$0xf]
        %v569 = vld [vmem:[%s2 + $0xd8] sm:$0xf]
        %v570 = vld [vmem:[%s2 + $0xdc] sm:$0xf]
        %v571 = vld [vmem:[%s2 + $0xe0] sm:$0xf]
        %v572 = vld [vmem:[%s2 + $0xe4] sm:$0xf]
        %v573 = vld [vmem:[%s2 + $0xe8] sm:$0xf]
        %v574 = vld [vmem:[%s2 + $0xec] sm:$0xf]
        %v575 = vld [vmem:[%s2 + $0xf0] sm:$0xf]
        %v576 = vld [vmem:[%s2 + $0xf4] sm:$0xf]
        %v577 = vld [vmem:[%s2 + $0xf8] sm:$0xf]
        %v578 = vld [vmem:[%s2 + $0xfc] sm:$0xf]
        %v643 = vunpack.c.l.b16 %v515
        %v644 = vunpack.c.l.b16 %v516
        %v645 = vunpack.c.l.b16 %v517
        %v646 = vunpack.c.l.b16 %v518
        %v647 = vunpack.c.l.b16 %v519
        %v648 = vunpack.c.l.b16 %v520
        %v649 = vunpack.c.l.b16 %v521
        %v650 = vunpack.c.l.b16 %v522
        %v651 = vunpack.c.l.b16 %v523
        %v652 = vunpack.c.l.b16 %v524
        %v653 = vunpack.c.l.b16 %v525
        %v654 = vunpack.c.l.b16 %v526
        %v655 = vunpack.c.l.b16 %v527
        %v656 = vunpack.c.l.b16 %v528
        %v657 = vunpack.c.l.b16 %v529
        %v658 = vunpack.c.l.b16 %v530
        %v659 = vunpack.c.l.b16 %v531
        %v660 = vunpack.c.l.b16 %v532
        %v661 = vunpack.c.l.b16 %v533
        %v662 = vunpack.c.l.b16 %v534
        %v663 = vunpack.c.l.b16 %v535
        %v664 = vunpack.c.l.b16 %v536
        %v665 = vunpack.c.l.b16 %v537
        %v666 = vunpack.c.l.b16 %v538
        %v667 = vunpack.c.l.b16 %v539
        %v668 = vunpack.c.l.b16 %v540
        %v669 = vunpack.c.l.b16 %v541
        %v670 = vunpack.c.l.b16 %v542
        %v671 = vunpack.c.l.b16 %v543
        %v672 = vunpack.c.l.b16 %v544
        %v673 = vunpack.c.l.b16 %v545
        %v674 = vunpack.c.l.b16 %v546
        %v675 = vunpack.c.l.b16 %v547
        %v676 = vunpack.c.l.b16 %v548
        %v677 = vunpack.c.l.b16 %v549
        %v678 = vunpack.c.l.b16 %v550
        %v679 = vunpack.c.l.b16 %v551
        %v680 = vunpack.c.l.b16 %v552
        %v681 = vunpack.c.l.b16 %v553
        %v682 = vunpack.c.l.b16 %v554
        %v683 = vunpack.c.l.b16 %v555
        %v684 = vunpack.c.l.b16 %v556
        %v685 = vunpack.c.l.b16 %v557
        %v686 = vunpack.c.l.b16 %v558
        %v687 = vunpack.c.l.b16 %v559
        %v688 = vunpack.c.l.b16 %v560
        %v689 = vunpack.c.l.b16 %v561
        %v690 = vunpack.c.l.b16 %v562
        %v691 = vunpack.c.l.b16 %v563
        %v692 = vunpack.c.l.b16 %v564
        %v693 = vunpack.c.l.b16 %v565
        %v694 = vunpack.c.l.b16 %v566
        %v695 = vunpack.c.l.b16 %v567
        %v696 = vunpack.c.l.b16 %v568
        %v697 = vunpack.c.l.b16 %v569
        %v698 = vunpack.c.l.b16 %v570
        %v699 = vunpack.c.l.b16 %v571
        %v700 = vunpack.c.l.b16 %v572
        %v701 = vunpack.c.l.b16 %v573
        %v702 = vunpack.c.l.b16 %v574
        %v703 = vunpack.c.l.b16 %v575
        %v704 = vunpack.c.l.b16 %v576
        %v705 = vunpack.c.l.b16 %v577
        %v706 = vunpack.c.l.b16 %v578
        %v707 = vpack.c.b16 %v644, %v643
        %v708 = vpack.c.b16 %v646, %v645
        %v709 = vpack.c.b16 %v648, %v647
        %v710 = vpack.c.b16 %v650, %v649
        %v711 = vpack.c.b16 %v652, %v651
        %v712 = vpack.c.b16 %v654, %v653
        %v713 = vpack.c.b16 %v656, %v655
        %v714 = vpack.c.b16 %v658, %v657
        %v715 = vpack.c.b16 %v660, %v659
        %v716 = vpack.c.b16 %v662, %v661
        %v717 = vpack.c.b16 %v664, %v663
        %v718 = vpack.c.b16 %v666, %v665
        %v719 = vpack.c.b16 %v668, %v667
        %v720 = vpack.c.b16 %v670, %v669
        %v721 = vpack.c.b16 %v672, %v671
        %v722 = vpack.c.b16 %v674, %v673
        %v723 = vpack.c.b16 %v676, %v675
        %v724 = vpack.c.b16 %v678, %v677
        %v725 = vpack.c.b16 %v680, %v679
        %v726 = vpack.c.b16 %v682, %v681
        %v727 = vpack.c.b16 %v684, %v683
        %v728 = vpack.c.b16 %v686, %v685
        %v729 = vpack.c.b16 %v688, %v687
        %v730 = vpack.c.b16 %v690, %v689
        %v731 = vpack.c.b16 %v692, %v691
        %v732 = vpack.c.b16 %v694, %v693
        %v733 = vpack.c.b16 %v696, %v695
        %v734 = vpack.c.b16 %v698, %v697
        %v735 = vpack.c.b16 %v700, %v699
        %v736 = vpack.c.b16 %v702, %v701
        %v737 = vpack.c.b16 %v704, %v703
        %v738 = vpack.c.b16 %v706, %v705
        %771 = vmatprep.subr.bf16.mxu0 0
        %772 = vmatpush1.bf16.msra.mxu0 %v707
        %773 = vmatprep.subr.bf16.mxu0 0
        %774 = vmatpush1.bf16.msra.mxu0 %v708
        %775 = vmatprep.subr.bf16.mxu0 0
        %776 = vmatpush1.bf16.msra.mxu0 %v709
        %777 = vmatprep.subr.bf16.mxu0 0
        %778 = vmatpush1.bf16.msra.mxu0 %v710
        %779 = vmatprep.subr.bf16.mxu0 0
        %780 = vmatpush1.bf16.msra.mxu0 %v711
        %781 = vmatprep.subr.bf16.mxu0 0
        %782 = vmatpush1.bf16.msra.mxu0 %v712
        %783 = vmatprep.subr.bf16.mxu0 0
        %784 = vmatpush1.bf16.msra.mxu0 %v713
        %785 = vmatprep.subr.bf16.mxu0 0
        %786 = vmatpush1.bf16.msra.mxu0 %v714
        %787 = vmatprep.subr.bf16.mxu0 0
        %788 = vmatpush1.bf16.msra.mxu0 %v715
        %789 = vmatprep.subr.bf16.mxu0 0
        %790 = vmatpush1.bf16.msra.mxu0 %v716
        %791 = vmatprep.subr.bf16.mxu0 0
        %792 = vmatpush1.bf16.msra.mxu0 %v717
        %793 = vmatprep.subr.bf16.mxu0 0
        %794 = vmatpush1.bf16.msra.mxu0 %v718
        %795 = vmatprep.subr.bf16.mxu0 0
        %796 = vmatpush1.bf16.msra.mxu0 %v719
        %797 = vmatprep.subr.bf16.mxu0 0
        %798 = vmatpush1.bf16.msra.mxu0 %v720
        %799 = vmatprep.subr.bf16.mxu0 0
        %800 = vmatpush1.bf16.msra.mxu0 %v721
        %801 = vmatprep.subr.bf16.mxu0 0
        %802 = vmatpush1.bf16.msra.mxu0 %v722
        %803 = vmatprep.mubr.bf16.mxu0 %v508
        %804 = vmatmul.mubr.bf16.gmra.mrb[0].mxu0 %v507
        %v805 = vpop.f32.mrb[0].mxu0
        %v806 = vadd.f32 0.0, %v805
        %v807 = vpop.f32.mrb[0].mxu0
        %v808 = vpop.f32.mrb[0].mxu0
        %v809 = vadd.f32 0.0, %v808
        %v810 = vpop.f32.mrb[0].mxu0
        %811 = vmatprep.mubr.bf16.mxu0 %v512
        %812 = vmatmul.mubr.bf16.gmra.mrb[0].mxu0 %v511
        %v813 = vpop.f32.mrb[0].mxu0
        %v814 = vadd.f32 0.0, %v813
        %v815 = vpop.f32.mrb[0].mxu0
        %v816 = vpop.f32.mrb[0].mxu0
        %v817 = vadd.f32 0.0, %v816
        %v818 = vpop.f32.mrb[0].mxu0
        %819 = vdwg.mxu0
        %820 = vmatprep.subr.bf16.mxu0 0
        %821 = vmatpush1.bf16.msra.mxu0 %v723
        %822 = vmatprep.subr.bf16.mxu0 0
        %823 = vmatpush1.bf16.msra.mxu0 %v724
        %824 = vmatprep.subr.bf16.mxu0 0
        %825 = vmatpush1.bf16.msra.mxu0 %v725
        %826 = vmatprep.subr.bf16.mxu0 0
        %827 = vmatpush1.bf16.msra.mxu0 %v726
        %828 = vmatprep.subr.bf16.mxu0 0
        %829 = vmatpush1.bf16.msra.mxu0 %v727
        %830 = vmatprep.subr.bf16.mxu0 0
        %831 = vmatpush1.bf16.msra.mxu0 %v728
        %832 = vmatprep.subr.bf16.mxu0 0
        %833 = vmatpush1.bf16.msra.mxu0 %v729
        %834 = vmatprep.subr.bf16.mxu0 0
        %835 = vmatpush1.bf16.msra.mxu0 %v730
        %836 = vmatprep.subr.bf16.mxu0 0
        %837 = vmatpush1.bf16.msra.mxu0 %v731
        %838 = vmatprep.subr.bf16.mxu0 0
        %839 = vmatpush1.bf16.msra.mxu0 %v732
        %840 = vmatprep.subr.bf16.mxu0 0
        %841 = vmatpush1.bf16.msra.mxu0 %v733
        %842 = vmatprep.subr.bf16.mxu0 0
        %843 = vmatpush1.bf16.msra.mxu0 %v734
        %844 = vmatprep.subr.bf16.mxu0 0
        %845 = vmatpush1.bf16.msra.mxu0 %v735
        %846 = vmatprep.subr.bf16.mxu0 0
        %847 = vmatpush1.bf16.msra.mxu0 %v736
        %848 = vmatprep.subr.bf16.mxu0 0
        %849 = vmatpush1.bf16.msra.mxu0 %v737
        %850 = vmatprep.subr.bf16.mxu0 0
        %851 = vmatpush1.bf16.msra.mxu0 %v738
        %852 = vmatprep.mubr.bf16.mxu0 %v510
        %853 = vmatmul.mubr.bf16.gmra.mrb[0].mxu0 %v509
        %v854 = vpop.f32.mrb[0].mxu0
        %v855 = vadd.f32 %v806, %v854
        %v856 = vpop.f32.mrb[0].mxu0
        %v857 = vpop.f32.mrb[0].mxu0
        %v858 = vadd.f32 %v809, %v857
        %v859 = vpop.f32.mrb[0].mxu0
        %860 = vmatprep.mubr.bf16.mxu0 %v514
        %861 = vmatmul.mubr.bf16.gmra.mrb[0].mxu0 %v513
        %v862 = vpop.f32.mrb[0].mxu0
        %v863 = vadd.f32 %v814, %v862
        %v864 = vpop.f32.mrb[0].mxu0
        %v865 = vpop.f32.mrb[0].mxu0
        %v866 = vadd.f32 %v817, %v865
        %v867 = vpop.f32.mrb[0].mxu0
        %868 = vdwg.mxu0
        %v869 = vmax.f32 %v855, 0.0
        %v870 = vmax.f32 %v858, 0.0
        %v871 = vmax.f32 %v863, 0.0
        %v872 = vmax.f32 %v866, 0.0
        %873 = vst [vmem:[#allocation4] sm:$0xff] %v869
        %874 = vst [vmem:[#allocation4 + $0x8] sm:$0xff] %v870
        %875 = vst [vmem:[#allocation4 + $0x10] sm:$0xff] %v871
        %876 = vst [vmem:[#allocation4 + $0x18] sm:$0xff] %v872
        %v877 = vld [vmem:[#allocation4] sm:$0xff]
        %v878 = vld [vmem:[#allocation4 + $0x8] sm:$0xff]
        %v879 = vld [vmem:[#allocation4 + $0x10] sm:$0xff]
        %v880 = vld [vmem:[#allocation4 + $0x18] sm:$0xff]
        %v881 = vld [vmem:[#allocation4 + $0x1] sm:$0xff]
        %v882 = vld [vmem:[#allocation4 + $0x9] sm:$0xff]
        %v883 = vld [vmem:[#allocation4 + $0x11] sm:$0xff]
        %v884 = vld [vmem:[#allocation4 + $0x19] sm:$0xff]
        %v885 = vld [vmem:[#allocation4 + $0x2] sm:$0xff]
        %v886 = vld [vmem:[#allocation4 + $0xa] sm:$0xff]
        %v887 = vld [vmem:[#allocation4 + $0x12] sm:$0xff]
        %v888 = vld [vmem:[#allocation4 + $0x1a] sm:$0xff]
        %v889 = vld [vmem:[#allocation4 + $0x3] sm:$0xff]
        %v890 = vld [vmem:[#allocation4 + $0xb] sm:$0xff]
        %v891 = vld [vmem:[#allocation4 + $0x13] sm:$0xff]
        %v892 = vld [vmem:[#allocation4 + $0x1b] sm:$0xff]
        %v893 = vld [vmem:[#allocation4 + $0x4] sm:$0xff]
        %v894 = vld [vmem:[#allocation4 + $0xc] sm:$0xff]
        %v895 = vld [vmem:[#allocation4 + $0x14] sm:$0xff]
        %v896 = vld [vmem:[#allocation4 + $0x1c] sm:$0xff]
        %v897 = vld [vmem:[#allocation4 + $0x5] sm:$0xff]
        %v898 = vld [vmem:[#allocation4 + $0xd] sm:$0xff]
        %v899 = vld [vmem:[#allocation4 + $0x15] sm:$0xff]
        %v900 = vld [vmem:[#allocation4 + $0x1d] sm:$0xff]
        %v901 = vld [vmem:[#allocation4 + $0x6] sm:$0xff]
        %v902 = vld [vmem:[#allocation4 + $0xe] sm:$0xff]
        %v903 = vld [vmem:[#allocation4 + $0x16] sm:$0xff]
        %v904 = vld [vmem:[#allocation4 + $0x1e] sm:$0xff]
        %v905 = vld [vmem:[#allocation4 + $0x7] sm:$0xff]
        %v906 = vld [vmem:[#allocation4 + $0xf] sm:$0xff]
        %v907 = vld [vmem:[#allocation4 + $0x17] sm:$0xff]
        %v908 = vld [vmem:[#allocation4 + $0x1f] sm:$0xff]
        %v909 = vpack.c.bf16 %v878, %v877
        %v910 = vpack.c.bf16 %v882, %v881
        %v911 = vpack.c.bf16 %v886, %v885
        %v912 = vpack.c.bf16 %v890, %v889
        %v913 = vpack.c.bf16 %v894, %v893
        %v914 = vpack.c.bf16 %v898, %v897
        %v915 = vpack.c.bf16 %v902, %v901
        %v916 = vpack.c.bf16 %v906, %v905
        %v917 = vpack.c.bf16 %v880, %v879
        %v918 = vpack.c.bf16 %v884, %v883
        %v919 = vpack.c.bf16 %v888, %v887
        %v920 = vpack.c.bf16 %v892, %v891
        %v921 = vpack.c.bf16 %v896, %v895
        %v922 = vpack.c.bf16 %v900, %v899
        %v923 = vpack.c.bf16 %v904, %v903
        %v924 = vpack.c.bf16 %v908, %v907
        %v925 = vld [vmem:[%s3] sm:$0xf]
        %v926 = vld [vmem:[%s3 + $0x4] sm:$0xf]
        %v927 = vld [vmem:[%s3 + $0x8] sm:$0xf]
        %v928 = vld [vmem:[%s3 + $0xc] sm:$0xf]
        %v929 = vld [vmem:[%s3 + $0x10] sm:$0xf]
        %v930 = vld [vmem:[%s3 + $0x14] sm:$0xf]
        %v931 = vld [vmem:[%s3 + $0x18] sm:$0xf]
        %v932 = vld [vmem:[%s3 + $0x1c] sm:$0xf]
        %v933 = vld [vmem:[%s3 + $0x20] sm:$0xf]
        %v934 = vld [vmem:[%s3 + $0x24] sm:$0xf]
        %v935 = vld [vmem:[%s3 + $0x28] sm:$0xf]
        %v936 = vld [vmem:[%s3 + $0x2c] sm:$0xf]
        %v937 = vld [vmem:[%s3 + $0x30] sm:$0xf]
        %v938 = vld [vmem:[%s3 + $0x34] sm:$0xf]
        %v939 = vld [vmem:[%s3 + $0x38] sm:$0xf]
        %v940 = vld [vmem:[%s3 + $0x3c] sm:$0xf]
        %v941 = vld [vmem:[%s3 + $0x40] sm:$0xf]
        %v942 = vld [vmem:[%s3 + $0x44] sm:$0xf]
        %v943 = vld [vmem:[%s3 + $0x48] sm:$0xf]
        %v944 = vld [vmem:[%s3 + $0x4c] sm:$0xf]
        %v945 = vld [vmem:[%s3 + $0x50] sm:$0xf]
        %v946 = vld [vmem:[%s3 + $0x54] sm:$0xf]
        %v947 = vld [vmem:[%s3 + $0x58] sm:$0xf]
        %v948 = vld [vmem:[%s3 + $0x5c] sm:$0xf]
        %v949 = vld [vmem:[%s3 + $0x60] sm:$0xf]
        %v950 = vld [vmem:[%s3 + $0x64] sm:$0xf]
        %v951 = vld [vmem:[%s3 + $0x68] sm:$0xf]
        %v952 = vld [vmem:[%s3 + $0x6c] sm:$0xf]
        %v953 = vld [vmem:[%s3 + $0x70] sm:$0xf]
        %v954 = vld [vmem:[%s3 + $0x74] sm:$0xf]
        %v955 = vld [vmem:[%s3 + $0x78] sm:$0xf]
        %v956 = vld [vmem:[%s3 + $0x7c] sm:$0xf]
        %v957 = vld [vmem:[%s3 + $0x80] sm:$0xf]
        %v958 = vld [vmem:[%s3 + $0x84] sm:$0xf]
        %v959 = vld [vmem:[%s3 + $0x88] sm:$0xf]
        %v960 = vld [vmem:[%s3 + $0x8c] sm:$0xf]
        %v961 = vld [vmem:[%s3 + $0x90] sm:$0xf]
        %v962 = vld [vmem:[%s3 + $0x94] sm:$0xf]
        %v963 = vld [vmem:[%s3 + $0x98] sm:$0xf]
        %v964 = vld [vmem:[%s3 + $0x9c] sm:$0xf]
        %v965 = vld [vmem:[%s3 + $0xa0] sm:$0xf]
        %v966 = vld [vmem:[%s3 + $0xa4] sm:$0xf]
        %v967 = vld [vmem:[%s3 + $0xa8] sm:$0xf]
        %v968 = vld [vmem:[%s3 + $0xac] sm:$0xf]
        %v969 = vld [vmem:[%s3 + $0xb0] sm:$0xf]
        %v970 = vld [vmem:[%s3 + $0xb4] sm:$0xf]
        %v971 = vld [vmem:[%s3 + $0xb8] sm:$0xf]
        %v972 = vld [vmem:[%s3 + $0xbc] sm:$0xf]
        %v973 = vld [vmem:[%s3 + $0xc0] sm:$0xf]
        %v974 = vld [vmem:[%s3 + $0xc4] sm:$0xf]
        %v975 = vld [vmem:[%s3 + $0xc8] sm:$0xf]
        %v976 = vld [vmem:[%s3 + $0xcc] sm:$0xf]
        %v977 = vld [vmem:[%s3 + $0xd0] sm:$0xf]
        %v978 = vld [vmem:[%s3 + $0xd4] sm:$0xf]
        %v979 = vld [vmem:[%s3 + $0xd8] sm:$0xf]
        %v980 = vld [vmem:[%s3 + $0xdc] sm:$0xf]
        %v981 = vld [vmem:[%s3 + $0xe0] sm:$0xf]
        %v982 = vld [vmem:[%s3 + $0xe4] sm:$0xf]
        %v983 = vld [vmem:[%s3 + $0xe8] sm:$0xf]
        %v984 = vld [vmem:[%s3 + $0xec] sm:$0xf]
        %v985 = vld [vmem:[%s3 + $0xf0] sm:$0xf]
        %v986 = vld [vmem:[%s3 + $0xf4] sm:$0xf]
        %v987 = vld [vmem:[%s3 + $0xf8] sm:$0xf]
        %v988 = vld [vmem:[%s3 + $0xfc] sm:$0xf]
        %v989 = vld [vmem:[%s3 + $0x100] sm:$0xf]
        %v990 = vld [vmem:[%s3 + $0x104] sm:$0xf]
        %v991 = vld [vmem:[%s3 + $0x108] sm:$0xf]
        %v992 = vld [vmem:[%s3 + $0x10c] sm:$0xf]
        %v993 = vld [vmem:[%s3 + $0x110] sm:$0xf]
        %v994 = vld [vmem:[%s3 + $0x114] sm:$0xf]
        %v995 = vld [vmem:[%s3 + $0x118] sm:$0xf]
        %v996 = vld [vmem:[%s3 + $0x11c] sm:$0xf]
        %v997 = vld [vmem:[%s3 + $0x120] sm:$0xf]
        %v998 = vld [vmem:[%s3 + $0x124] sm:$0xf]
        %v999 = vld [vmem:[%s3 + $0x128] sm:$0xf]
        %v1000 = vld [vmem:[%s3 + $0x12c] sm:$0xf]
        %v1001 = vld [vmem:[%s3 + $0x130] sm:$0xf]
        %v1002 = vld [vmem:[%s3 + $0x134] sm:$0xf]
        %v1003 = vld [vmem:[%s3 + $0x138] sm:$0xf]
        %v1004 = vld [vmem:[%s3 + $0x13c] sm:$0xf]
        %v1005 = vld [vmem:[%s3 + $0x140] sm:$0xf]
        %v1006 = vld [vmem:[%s3 + $0x144] sm:$0xf]
        %v1007 = vld [vmem:[%s3 + $0x148] sm:$0xf]
        %v1008 = vld [vmem:[%s3 + $0x14c] sm:$0xf]
        %v1009 = vld [vmem:[%s3 + $0x150] sm:$0xf]
        %v1010 = vld [vmem:[%s3 + $0x154] sm:$0xf]
        %v1011 = vld [vmem:[%s3 + $0x158] sm:$0xf]
        %v1012 = vld [vmem:[%s3 + $0x15c] sm:$0xf]
        %v1013 = vld [vmem:[%s3 + $0x160] sm:$0xf]
        %v1014 = vld [vmem:[%s3 + $0x164] sm:$0xf]
        %v1015 = vld [vmem:[%s3 + $0x168] sm:$0xf]
        %v1016 = vld [vmem:[%s3 + $0x16c] sm:$0xf]
        %v1017 = vld [vmem:[%s3 + $0x170] sm:$0xf]
        %v1018 = vld [vmem:[%s3 + $0x174] sm:$0xf]
        %v1019 = vld [vmem:[%s3 + $0x178] sm:$0xf]
        %v1020 = vld [vmem:[%s3 + $0x17c] sm:$0xf]
        %v1021 = vld [vmem:[%s3 + $0x180] sm:$0xf]
        %v1022 = vld [vmem:[%s3 + $0x184] sm:$0xf]
        %v1023 = vld [vmem:[%s3 + $0x188] sm:$0xf]
        %v1024 = vld [vmem:[%s3 + $0x18c] sm:$0xf]
        %v1025 = vld [vmem:[%s3 + $0x190] sm:$0xf]
        %v1026 = vld [vmem:[%s3 + $0x194] sm:$0xf]
        %v1027 = vld [vmem:[%s3 + $0x198] sm:$0xf]
        %v1028 = vld [vmem:[%s3 + $0x19c] sm:$0xf]
        %v1029 = vld [vmem:[%s3 + $0x1a0] sm:$0xf]
        %v1030 = vld [vmem:[%s3 + $0x1a4] sm:$0xf]
        %v1031 = vld [vmem:[%s3 + $0x1a8] sm:$0xf]
        %v1032 = vld [vmem:[%s3 + $0x1ac] sm:$0xf]
        %v1033 = vld [vmem:[%s3 + $0x1b0] sm:$0xf]
        %v1034 = vld [vmem:[%s3 + $0x1b4] sm:$0xf]
        %v1035 = vld [vmem:[%s3 + $0x1b8] sm:$0xf]
        %v1036 = vld [vmem:[%s3 + $0x1bc] sm:$0xf]
        %v1037 = vld [vmem:[%s3 + $0x1c0] sm:$0xf]
        %v1038 = vld [vmem:[%s3 + $0x1c4] sm:$0xf]
        %v1039 = vld [vmem:[%s3 + $0x1c8] sm:$0xf]
        %v1040 = vld [vmem:[%s3 + $0x1cc] sm:$0xf]
        %v1041 = vld [vmem:[%s3 + $0x1d0] sm:$0xf]
        %v1042 = vld [vmem:[%s3 + $0x1d4] sm:$0xf]
        %v1043 = vld [vmem:[%s3 + $0x1d8] sm:$0xf]
        %v1044 = vld [vmem:[%s3 + $0x1dc] sm:$0xf]
        %v1045 = vld [vmem:[%s3 + $0x1e0] sm:$0xf]
        %v1046 = vld [vmem:[%s3 + $0x1e4] sm:$0xf]
        %v1047 = vld [vmem:[%s3 + $0x1e8] sm:$0xf]
        %v1048 = vld [vmem:[%s3 + $0x1ec] sm:$0xf]
        %v1049 = vld [vmem:[%s3 + $0x1f0] sm:$0xf]
        %v1050 = vld [vmem:[%s3 + $0x1f4] sm:$0xf]
        %v1051 = vld [vmem:[%s3 + $0x1f8] sm:$0xf]
        %v1052 = vld [vmem:[%s3 + $0x1fc] sm:$0xf]
        %v1053 = vld [vmem:[%s4 + $0x4] sm:$0x1]
        %v1054 = vlaneseq
        %v1055 = vshrl.u32 %v1054, 7
        %v1056 = vsub.s32 0, %v1055
        %v1057 = vrot.slane %v1053, %v1056
        %v1186 = vunpack.c.l.b16 %v925
        %v1187 = vunpack.c.l.b16 %v926
        %v1188 = vunpack.c.l.b16 %v927
        %v1189 = vunpack.c.l.b16 %v928
        %v1190 = vunpack.c.l.b16 %v929
        %v1191 = vunpack.c.l.b16 %v930
        %v1192 = vunpack.c.l.b16 %v931
        %v1193 = vunpack.c.l.b16 %v932
        %v1194 = vunpack.c.l.b16 %v933
        %v1195 = vunpack.c.l.b16 %v934
        %v1196 = vunpack.c.l.b16 %v935
        %v1197 = vunpack.c.l.b16 %v936
        %v1198 = vunpack.c.l.b16 %v937
        %v1199 = vunpack.c.l.b16 %v938
        %v1200 = vunpack.c.l.b16 %v939
        %v1201 = vunpack.c.l.b16 %v940
        %v1202 = vunpack.c.l.b16 %v941
        %v1203 = vunpack.c.l.b16 %v942
        %v1204 = vunpack.c.l.b16 %v943
        %v1205 = vunpack.c.l.b16 %v944
        %v1206 = vunpack.c.l.b16 %v945
        %v1207 = vunpack.c.l.b16 %v946
        %v1208 = vunpack.c.l.b16 %v947
        %v1209 = vunpack.c.l.b16 %v948
        %v1210 = vunpack.c.l.b16 %v949
        %v1211 = vunpack.c.l.b16 %v950
        %v1212 = vunpack.c.l.b16 %v951
        %v1213 = vunpack.c.l.b16 %v952
        %v1214 = vunpack.c.l.b16 %v953
        %v1215 = vunpack.c.l.b16 %v954
        %v1216 = vunpack.c.l.b16 %v955
        %v1217 = vunpack.c.l.b16 %v956
        %v1218 = vunpack.c.l.b16 %v957
        %v1219 = vunpack.c.l.b16 %v958
        %v1220 = vunpack.c.l.b16 %v959
        %v1221 = vunpack.c.l.b16 %v960
        %v1222 = vunpack.c.l.b16 %v961
        %v1223 = vunpack.c.l.b16 %v962
        %v1224 = vunpack.c.l.b16 %v963
        %v1225 = vunpack.c.l.b16 %v964
        %v1226 = vunpack.c.l.b16 %v965
        %v1227 = vunpack.c.l.b16 %v966
        %v1228 = vunpack.c.l.b16 %v967
        %v1229 = vunpack.c.l.b16 %v968
        %v1230 = vunpack.c.l.b16 %v969
        %v1231 = vunpack.c.l.b16 %v970
        %v1232 = vunpack.c.l.b16 %v971
        %v1233 = vunpack.c.l.b16 %v972
        %v1234 = vunpack.c.l.b16 %v973
        %v1235 = vunpack.c.l.b16 %v974
        %v1236 = vunpack.c.l.b16 %v975
        %v1237 = vunpack.c.l.b16 %v976
        %v1238 = vunpack.c.l.b16 %v977
        %v1239 = vunpack.c.l.b16 %v978
        %v1240 = vunpack.c.l.b16 %v979
        %v1241 = vunpack.c.l.b16 %v980
        %v1242 = vunpack.c.l.b16 %v981
        %v1243 = vunpack.c.l.b16 %v982
        %v1244 = vunpack.c.l.b16 %v983
        %v1245 = vunpack.c.l.b16 %v984
        %v1246 = vunpack.c.l.b16 %v985
        %v1247 = vunpack.c.l.b16 %v986
        %v1248 = vunpack.c.l.b16 %v987
        %v1249 = vunpack.c.l.b16 %v988
        %v1250 = vunpack.c.l.b16 %v989
        %v1251 = vunpack.c.l.b16 %v990
        %v1252 = vunpack.c.l.b16 %v991
        %v1253 = vunpack.c.l.b16 %v992
        %v1254 = vunpack.c.l.b16 %v993
        %v1255 = vunpack.c.l.b16 %v994
        %v1256 = vunpack.c.l.b16 %v995
        %v1257 = vunpack.c.l.b16 %v996
        %v1258 = vunpack.c.l.b16 %v997
        %v1259 = vunpack.c.l.b16 %v998
        %v1260 = vunpack.c.l.b16 %v999
        %v1261 = vunpack.c.l.b16 %v1000
        %v1262 = vunpack.c.l.b16 %v1001
        %v1263 = vunpack.c.l.b16 %v1002
        %v1264 = vunpack.c.l.b16 %v1003
        %v1265 = vunpack.c.l.b16 %v1004
        %v1266 = vunpack.c.l.b16 %v1005
        %v1267 = vunpack.c.l.b16 %v1006
        %v1268 = vunpack.c.l.b16 %v1007
        %v1269 = vunpack.c.l.b16 %v1008
        %v1270 = vunpack.c.l.b16 %v1009
        %v1271 = vunpack.c.l.b16 %v1010
        %v1272 = vunpack.c.l.b16 %v1011
        %v1273 = vunpack.c.l.b16 %v1012
        %v1274 = vunpack.c.l.b16 %v1013
        %v1275 = vunpack.c.l.b16 %v1014
        %v1276 = vunpack.c.l.b16 %v1015
        %v1277 = vunpack.c.l.b16 %v1016
        %v1278 = vunpack.c.l.b16 %v1017
        %v1279 = vunpack.c.l.b16 %v1018
        %v1280 = vunpack.c.l.b16 %v1019
        %v1281 = vunpack.c.l.b16 %v1020
        %v1282 = vunpack.c.l.b16 %v1021
        %v1283 = vunpack.c.l.b16 %v1022
        %v1284 = vunpack.c.l.b16 %v1023
        %v1285 = vunpack.c.l.b16 %v1024
        %v1286 = vunpack.c.l.b16 %v1025
        %v1287 = vunpack.c.l.b16 %v1026
        %v1288 = vunpack.c.l.b16 %v1027
        %v1289 = vunpack.c.l.b16 %v1028
        %v1290 = vunpack.c.l.b16 %v1029
        %v1291 = vunpack.c.l.b16 %v1030
        %v1292 = vunpack.c.l.b16 %v1031
        %v1293 = vunpack.c.l.b16 %v1032
        %v1294 = vunpack.c.l.b16 %v1033
        %v1295 = vunpack.c.l.b16 %v1034
        %v1296 = vunpack.c.l.b16 %v1035
        %v1297 = vunpack.c.l.b16 %v1036
        %v1298 = vunpack.c.l.b16 %v1037
        %v1299 = vunpack.c.l.b16 %v1038
        %v1300 = vunpack.c.l.b16 %v1039
        %v1301 = vunpack.c.l.b16 %v1040
        %v1302 = vunpack.c.l.b16 %v1041
        %v1303 = vunpack.c.l.b16 %v1042
        %v1304 = vunpack.c.l.b16 %v1043
        %v1305 = vunpack.c.l.b16 %v1044
        %v1306 = vunpack.c.l.b16 %v1045
        %v1307 = vunpack.c.l.b16 %v1046
        %v1308 = vunpack.c.l.b16 %v1047
        %v1309 = vunpack.c.l.b16 %v1048
        %v1310 = vunpack.c.l.b16 %v1049
        %v1311 = vunpack.c.l.b16 %v1050
        %v1312 = vunpack.c.l.b16 %v1051
        %v1313 = vunpack.c.l.b16 %v1052
        %v1314 = vpack.c.b16 %v1187, %v1186
        %v1315 = vpack.c.b16 %v1189, %v1188
        %v1316 = vpack.c.b16 %v1191, %v1190
        %v1317 = vpack.c.b16 %v1193, %v1192
        %v1318 = vpack.c.b16 %v1195, %v1194
        %v1319 = vpack.c.b16 %v1197, %v1196
        %v1320 = vpack.c.b16 %v1199, %v1198
        %v1321 = vpack.c.b16 %v1201, %v1200
        %v1322 = vpack.c.b16 %v1203, %v1202
        %v1323 = vpack.c.b16 %v1205, %v1204
        %v1324 = vpack.c.b16 %v1207, %v1206
        %v1325 = vpack.c.b16 %v1209, %v1208
        %v1326 = vpack.c.b16 %v1211, %v1210
        %v1327 = vpack.c.b16 %v1213, %v1212
        %v1328 = vpack.c.b16 %v1215, %v1214
        %v1329 = vpack.c.b16 %v1217, %v1216
        %v1330 = vpack.c.b16 %v1219, %v1218
        %v1331 = vpack.c.b16 %v1221, %v1220
        %v1332 = vpack.c.b16 %v1223, %v1222
        %v1333 = vpack.c.b16 %v1225, %v1224
        %v1334 = vpack.c.b16 %v1227, %v1226
        %v1335 = vpack.c.b16 %v1229, %v1228
        %v1336 = vpack.c.b16 %v1231, %v1230
        %v1337 = vpack.c.b16 %v1233, %v1232
        %v1338 = vpack.c.b16 %v1235, %v1234
        %v1339 = vpack.c.b16 %v1237, %v1236
        %v1340 = vpack.c.b16 %v1239, %v1238
        %v1341 = vpack.c.b16 %v1241, %v1240
        %v1342 = vpack.c.b16 %v1243, %v1242
        %v1343 = vpack.c.b16 %v1245, %v1244
        %v1344 = vpack.c.b16 %v1247, %v1246
        %v1345 = vpack.c.b16 %v1249, %v1248
        %v1346 = vpack.c.b16 %v1251, %v1250
        %v1347 = vpack.c.b16 %v1253, %v1252
        %v1348 = vpack.c.b16 %v1255, %v1254
        %v1349 = vpack.c.b16 %v1257, %v1256
        %v1350 = vpack.c.b16 %v1259, %v1258
        %v1351 = vpack.c.b16 %v1261, %v1260
        %v1352 = vpack.c.b16 %v1263, %v1262
        %v1353 = vpack.c.b16 %v1265, %v1264
        %v1354 = vpack.c.b16 %v1267, %v1266
        %v1355 = vpack.c.b16 %v1269, %v1268
        %v1356 = vpack.c.b16 %v1271, %v1270
        %v1357 = vpack.c.b16 %v1273, %v1272
        %v1358 = vpack.c.b16 %v1275, %v1274
        %v1359 = vpack.c.b16 %v1277, %v1276
        %v1360 = vpack.c.b16 %v1279, %v1278
        %v1361 = vpack.c.b16 %v1281, %v1280
        %v1362 = vpack.c.b16 %v1283, %v1282
        %v1363 = vpack.c.b16 %v1285, %v1284
        %v1364 = vpack.c.b16 %v1287, %v1286
        %v1365 = vpack.c.b16 %v1289, %v1288
        %v1366 = vpack.c.b16 %v1291, %v1290
        %v1367 = vpack.c.b16 %v1293, %v1292
        %v1368 = vpack.c.b16 %v1295, %v1294
        %v1369 = vpack.c.b16 %v1297, %v1296
        %v1370 = vpack.c.b16 %v1299, %v1298
        %v1371 = vpack.c.b16 %v1301, %v1300
        %v1372 = vpack.c.b16 %v1303, %v1302
        %v1373 = vpack.c.b16 %v1305, %v1304
        %v1374 = vpack.c.b16 %v1307, %v1306
        %v1375 = vpack.c.b16 %v1309, %v1308
        %v1376 = vpack.c.b16 %v1311, %v1310
        %v1377 = vpack.c.b16 %v1313, %v1312
        %1442 = vmatprep.subr.bf16.mxu0 0
        %1443 = vmatpush1.bf16.msra.mxu0 %v1314
        %1444 = vmatprep.subr.bf16.mxu0 0
        %1445 = vmatpush1.bf16.msra.mxu0 %v1315
        %1446 = vmatprep.subr.bf16.mxu0 0
        %1447 = vmatpush1.bf16.msra.mxu0 %v1316
        %1448 = vmatprep.subr.bf16.mxu0 0
        %1449 = vmatpush1.bf16.msra.mxu0 %v1317
        %1450 = vmatprep.subr.bf16.mxu0 0
        %1451 = vmatpush1.bf16.msra.mxu0 %v1318
        %1452 = vmatprep.subr.bf16.mxu0 0
        %1453 = vmatpush1.bf16.msra.mxu0 %v1319
        %1454 = vmatprep.subr.bf16.mxu0 0
        %1455 = vmatpush1.bf16.msra.mxu0 %v1320
        %1456 = vmatprep.subr.bf16.mxu0 0
        %1457 = vmatpush1.bf16.msra.mxu0 %v1321
        %1458 = vmatprep.subr.bf16.mxu0 0
        %1459 = vmatpush1.bf16.msra.mxu0 %v1322
        %1460 = vmatprep.subr.bf16.mxu0 0
        %1461 = vmatpush1.bf16.msra.mxu0 %v1323
        %1462 = vmatprep.subr.bf16.mxu0 0
        %1463 = vmatpush1.bf16.msra.mxu0 %v1324
        %1464 = vmatprep.subr.bf16.mxu0 0
        %1465 = vmatpush1.bf16.msra.mxu0 %v1325
        %1466 = vmatprep.subr.bf16.mxu0 0
        %1467 = vmatpush1.bf16.msra.mxu0 %v1326
        %1468 = vmatprep.subr.bf16.mxu0 0
        %1469 = vmatpush1.bf16.msra.mxu0 %v1327
        %1470 = vmatprep.subr.bf16.mxu0 0
        %1471 = vmatpush1.bf16.msra.mxu0 %v1328
        %1472 = vmatprep.subr.bf16.mxu0 0
        %1473 = vmatpush1.bf16.msra.mxu0 %v1329
        %1474 = vmatprep.mubr.bf16.mxu0 %v910
        %1475 = vmatmul.mubr.bf16.gmra.mrb[0].mxu0 %v909
        %v1476 = vpop.f32.mrb[0].mxu0
        %v1477 = vadd.f32 %v1057, %v1476
        %v1478 = vpop.f32.mrb[0].mxu0
        %v1479 = vpop.f32.mrb[0].mxu0
        %v1480 = vadd.f32 %v1057, %v1479
        %v1481 = vpop.f32.mrb[0].mxu0
        %1482 = vmatprep.mubr.bf16.mxu0 %v918
        %1483 = vmatmul.mubr.bf16.gmra.mrb[0].mxu0 %v917
        %v1484 = vpop.f32.mrb[0].mxu0
        %v1485 = vadd.f32 %v1057, %v1484
        %v1486 = vpop.f32.mrb[0].mxu0
        %v1487 = vpop.f32.mrb[0].mxu0
        %v1488 = vadd.f32 %v1057, %v1487
        %v1489 = vpop.f32.mrb[0].mxu0
        %1490 = vdwg.mxu0
        %1491 = vmatprep.subr.bf16.mxu0 0
        %1492 = vmatpush1.bf16.msra.mxu0 %v1330
        %1493 = vmatprep.subr.bf16.mxu0 0
        %1494 = vmatpush1.bf16.msra.mxu0 %v1331
        %1495 = vmatprep.subr.bf16.mxu0 0
        %1496 = vmatpush1.bf16.msra.mxu0 %v1332
        %1497 = vmatprep.subr.bf16.mxu0 0
        %1498 = vmatpush1.bf16.msra.mxu0 %v1333
        %1499 = vmatprep.subr.bf16.mxu0 0
        %1500 = vmatpush1.bf16.msra.mxu0 %v1334
        %1501 = vmatprep.subr.bf16.mxu0 0
        %1502 = vmatpush1.bf16.msra.mxu0 %v1335
        %1503 = vmatprep.subr.bf16.mxu0 0
        %1504 = vmatpush1.bf16.msra.mxu0 %v1336
        %1505 = vmatprep.subr.bf16.mxu0 0
        %1506 = vmatpush1.bf16.msra.mxu0 %v1337
        %1507 = vmatprep.subr.bf16.mxu0 0
        %1508 = vmatpush1.bf16.msra.mxu0 %v1338
        %1509 = vmatprep.subr.bf16.mxu0 0
        %1510 = vmatpush1.bf16.msra.mxu0 %v1339
        %1511 = vmatprep.subr.bf16.mxu0 0
        %1512 = vmatpush1.bf16.msra.mxu0 %v1340
        %1513 = vmatprep.subr.bf16.mxu0 0
        %1514 = vmatpush1.bf16.msra.mxu0 %v1341
        %1515 = vmatprep.subr.bf16.mxu0 0
        %1516 = vmatpush1.bf16.msra.mxu0 %v1342
        %1517 = vmatprep.subr.bf16.mxu0 0
        %1518 = vmatpush1.bf16.msra.mxu0 %v1343
        %1519 = vmatprep.subr.bf16.mxu0 0
        %1520 = vmatpush1.bf16.msra.mxu0 %v1344
        %1521 = vmatprep.subr.bf16.mxu0 0
        %1522 = vmatpush1.bf16.msra.mxu0 %v1345
        %1523 = vmatprep.mubr.bf16.mxu0 %v912
        %1524 = vmatmul.mubr.bf16.gmra.mrb[0].mxu0 %v911
        %v1525 = vpop.f32.mrb[0].mxu0
        %v1526 = vadd.f32 %v1477, %v1525
        %v1527 = vpop.f32.mrb[0].mxu0
        %v1528 = vpop.f32.mrb[0].mxu0
        %v1529 = vadd.f32 %v1480, %v1528
        %v1530 = vpop.f32.mrb[0].mxu0
        %1531 = vmatprep.mubr.bf16.mxu0 %v920
        %1532 = vmatmul.mubr.bf16.gmra.mrb[0].mxu0 %v919
        %v1533 = vpop.f32.mrb[0].mxu0
        %v1534 = vadd.f32 %v1485, %v1533
        %v1535 = vpop.f32.mrb[0].mxu0
        %v1536 = vpop.f32.mrb[0].mxu0
        %v1537 = vadd.f32 %v1488, %v1536
        %v1538 = vpop.f32.mrb[0].mxu0
        %1539 = vdwg.mxu0
        %1540 = vmatprep.subr.bf16.mxu0 0
        %1541 = vmatpush1.bf16.msra.mxu0 %v1346
        %1542 = vmatprep.subr.bf16.mxu0 0
        %1543 = vmatpush1.bf16.msra.mxu0 %v1347
        %1544 = vmatprep.subr.bf16.mxu0 0
        %1545 = vmatpush1.bf16.msra.mxu0 %v1348
        %1546 = vmatprep.subr.bf16.mxu0 0
        %1547 = vmatpush1.bf16.msra.mxu0 %v1349
        %1548 = vmatprep.subr.bf16.mxu0 0
        %1549 = vmatpush1.bf16.msra.mxu0 %v1350
        %1550 = vmatprep.subr.bf16.mxu0 0
        %1551 = vmatpush1.bf16.msra.mxu0 %v1351
        %1552 = vmatprep.subr.bf16.mxu0 0
        %1553 = vmatpush1.bf16.msra.mxu0 %v1352
        %1554 = vmatprep.subr.bf16.mxu0 0
        %1555 = vmatpush1.bf16.msra.mxu0 %v1353
        %1556 = vmatprep.subr.bf16.mxu0 0
        %1557 = vmatpush1.bf16.msra.mxu0 %v1354
        %1558 = vmatprep.subr.bf16.mxu0 0
        %1559 = vmatpush1.bf16.msra.mxu0 %v1355
        %1560 = vmatprep.subr.bf16.mxu0 0
        %1561 = vmatpush1.bf16.msra.mxu0 %v1356
        %1562 = vmatprep.subr.bf16.mxu0 0
        %1563 = vmatpush1.bf16.msra.mxu0 %v1357
        %1564 = vmatprep.subr.bf16.mxu0 0
        %1565 = vmatpush1.bf16.msra.mxu0 %v1358
        %1566 = vmatprep.subr.bf16.mxu0 0
        %1567 = vmatpush1.bf16.msra.mxu0 %v1359
        %1568 = vmatprep.subr.bf16.mxu0 0
        %1569 = vmatpush1.bf16.msra.mxu0 %v1360
        %1570 = vmatprep.subr.bf16.mxu0 0
        %1571 = vmatpush1.bf16.msra.mxu0 %v1361
        %1572 = vmatprep.mubr.bf16.mxu0 %v914
        %1573 = vmatmul.mubr.bf16.gmra.mrb[0].mxu0 %v913
        %v1574 = vpop.f32.mrb[0].mxu0
        %v1575 = vadd.f32 %v1526, %v1574
        %v1576 = vpop.f32.mrb[0].mxu0
        %v1577 = vpop.f32.mrb[0].mxu0
        %v1578 = vadd.f32 %v1529, %v1577
        %v1579 = vpop.f32.mrb[0].mxu0
        %1580 = vmatprep.mubr.bf16.mxu0 %v922
        %1581 = vmatmul.mubr.bf16.gmra.mrb[0].mxu0 %v921
        %v1582 = vpop.f32.mrb[0].mxu0
        %v1583 = vadd.f32 %v1534, %v1582
        %v1584 = vpop.f32.mrb[0].mxu0
        %v1585 = vpop.f32.mrb[0].mxu0
        %v1586 = vadd.f32 %v1537, %v1585
        %v1587 = vpop.f32.mrb[0].mxu0
        %1588 = vdwg.mxu0
        %1589 = vmatprep.subr.bf16.mxu0 0
        %1590 = vmatpush1.bf16.msra.mxu0 %v1362
        %1591 = vmatprep.subr.bf16.mxu0 0
        %1592 = vmatpush1.bf16.msra.mxu0 %v1363
        %1593 = vmatprep.subr.bf16.mxu0 0
        %1594 = vmatpush1.bf16.msra.mxu0 %v1364
        %1595 = vmatprep.subr.bf16.mxu0 0
        %1596 = vmatpush1.bf16.msra.mxu0 %v1365
        %1597 = vmatprep.subr.bf16.mxu0 0
        %1598 = vmatpush1.bf16.msra.mxu0 %v1366
        %1599 = vmatprep.subr.bf16.mxu0 0
        %1600 = vmatpush1.bf16.msra.mxu0 %v1367
        %1601 = vmatprep.subr.bf16.mxu0 0
        %1602 = vmatpush1.bf16.msra.mxu0 %v1368
        %1603 = vmatprep.subr.bf16.mxu0 0
        %1604 = vmatpush1.bf16.msra.mxu0 %v1369
        %1605 = vmatprep.subr.bf16.mxu0 0
        %1606 = vmatpush1.bf16.msra.mxu0 %v1370
        %1607 = vmatprep.subr.bf16.mxu0 0
        %1608 = vmatpush1.bf16.msra.mxu0 %v1371
        %1609 = vmatprep.subr.bf16.mxu0 0
        %1610 = vmatpush1.bf16.msra.mxu0 %v1372
        %1611 = vmatprep.subr.bf16.mxu0 0
        %1612 = vmatpush1.bf16.msra.mxu0 %v1373
        %1613 = vmatprep.subr.bf16.mxu0 0
        %1614 = vmatpush1.bf16.msra.mxu0 %v1374
        %1615 = vmatprep.subr.bf16.mxu0 0
        %1616 = vmatpush1.bf16.msra.mxu0 %v1375
        %1617 = vmatprep.subr.bf16.mxu0 0
        %1618 = vmatpush1.bf16.msra.mxu0 %v1376
        %1619 = vmatprep.subr.bf16.mxu0 0
        %1620 = vmatpush1.bf16.msra.mxu0 %v1377
        %1621 = vmatprep.mubr.bf16.mxu0 %v916
        %1622 = vmatmul.mubr.bf16.gmra.mrb[0].mxu0 %v915
        %v1623 = vpop.f32.mrb[0].mxu0
        %v1624 = vadd.f32 %v1575, %v1623
        %v1625 = vpop.f32.mrb[0].mxu0
        %v1626 = vpop.f32.mrb[0].mxu0
        %v1627 = vadd.f32 %v1578, %v1626
        %v1628 = vpop.f32.mrb[0].mxu0
        %1629 = vmatprep.mubr.bf16.mxu0 %v924
        %1630 = vmatmul.mubr.bf16.gmra.mrb[0].mxu0 %v923
        %v1631 = vpop.f32.mrb[0].mxu0
        %v1632 = vadd.f32 %v1583, %v1631
        %v1633 = vpop.f32.mrb[0].mxu0
        %v1634 = vpop.f32.mrb[0].mxu0
        %v1635 = vadd.f32 %v1586, %v1634
        %v1636 = vpop.f32.mrb[0].mxu0
        %1637 = vdwg.mxu0
        %v1638 = vmax.f32 %v1624, 0.0
        %v1639 = vmax.f32 %v1627, 0.0
        %v1640 = vmax.f32 %v1632, 0.0
        %v1641 = vmax.f32 %v1635, 0.0
        %v1642 = vld [vmem:[%s4 + $0x2] sm:$0x1]
        %v1643 = vlaneseq
        %v1644 = vshrl.u32 %v1643, 7
        %v1645 = vsub.s32 0, %v1644
        %v1646 = vrot.slane %v1642, %v1645
        %v1647 = vmul.f32 %v1638, %v1646
        %v1648 = vmul.f32 %v1639, %v1646
        %v1649 = vmul.f32 %v1640, %v1646
        %v1650 = vmul.f32 %v1641, %v1646
        %v1651 = vld [vmem:[%s4 + $0x3] sm:$0x1]
        %v1652 = vlaneseq
        %v1653 = vshrl.u32 %v1652, 7
        %v1654 = vsub.s32 0, %v1653
        %v1655 = vrot.slane %v1651, %v1654
        %v1656 = vadd.f32 %v1647, %v1655
        %v1657 = vadd.f32 %v1648, %v1655
        %v1658 = vadd.f32 %v1649, %v1655
        %v1659 = vadd.f32 %v1650, %v1655
        %v1660 = vlaneseq
        %v1661 = vshrl.u32 %v1660, 7
        %v1662 = vadd.s32 %v1661, 8
        %vm1663 = vcmp.lt.s32.totalorder %v1661, 6
        %vm1664 = vcmp.lt.s32.totalorder %v1662, 6
        %v1665 = vsel %vm1663, 1, 0
        %v1666 = vsel %vm1664, 1, 0
        %vm1667 = vcmp.eq.s32.totalorder %v1665, 1
        %vm1668 = vcmp.eq.s32.totalorder %v1666, 1
        %v1669 = vsel %vm1667, %v1656, -inf
        %v1670 = vsel %vm1668, %v1657, -inf
        %v1671 = vsel %vm1667, %v1658, -inf
        %v1672 = vsel %vm1668, %v1659, -inf
        %v1673 = vmax.f32 %v1669, %v1670
        %v1674 = vrot.slane %v1673, 4
        %v1675 = vmax.f32 %v1673, %v1674
        %v1676 = vrot.slane %v1675, 2
        %v1677 = vmax.f32 %v1675, %v1676
        %v1678 = vrot.slane %v1677, 1
        %v1679 = vmax.f32 %v1677, %v1678
        %v1680 = vmax.f32 %v1671, %v1672
        %v1681 = vrot.slane %v1680, 4
        %v1682 = vmax.f32 %v1680, %v1681
        %v1683 = vrot.slane %v1682, 2
        %v1684 = vmax.f32 %v1682, %v1683
        %v1685 = vrot.slane %v1684, 1
        %v1686 = vmax.f32 %v1684, %v1685
        %v1687 = vpack.c.bf16 %v1679, %v1679
        %v1688 = vpack.c.bf16 %v1686, %v1686
        %v1689 = vld [vmem:[%s5] sm:$0xf]
        %v1690 = vld [vmem:[%s5 + $0x4] sm:$0xf]
        %v1691 = vld [vmem:[%s5 + $0x8] sm:$0xf]
        %v1692 = vld [vmem:[%s5 + $0xc] sm:$0xf]
        %v1693 = vld [vmem:[%s5 + $0x10] sm:$0xf]
        %v1694 = vld [vmem:[%s5 + $0x14] sm:$0xf]
        %v1695 = vld [vmem:[%s5 + $0x18] sm:$0xf]
        %v1696 = vld [vmem:[%s5 + $0x1c] sm:$0xf]
        %v1697 = vld [vmem:[%s5 + $0x20] sm:$0xf]
        %v1698 = vld [vmem:[%s5 + $0x24] sm:$0xf]
        %v1699 = vld [vmem:[%s5 + $0x28] sm:$0xf]
        %v1700 = vld [vmem:[%s5 + $0x2c] sm:$0xf]
        %v1701 = vld [vmem:[%s5 + $0x30] sm:$0xf]
        %v1702 = vld [vmem:[%s5 + $0x34] sm:$0xf]
        %v1703 = vld [vmem:[%s5 + $0x38] sm:$0xf]
        %v1704 = vld [vmem:[%s5 + $0x3c] sm:$0xf]
        %v1705 = vld [vmem:[%s6] sm:$0x1]
        %v1707 = vlaneseq
        %v1708 = vshrl.u32 %v1707, 7
        %v1709 = vsub.s32 0, %v1708
        %v1710 = vrot.slane %v1705, %v1709
        %v1714 = vunpack.c.l.b16 %v1687
        %v1715 = vunpack.c.l.b16 %v1688
        %vm1716 = vcmask 1041409
        %v1717 = vsel %vm1716, %v1715, %v1714
        %v1718 = vpack.c.b16 %v1717, %v1717
        %v1736 = vunpack.c.l.b16 %v1689
        %v1737 = vunpack.c.l.b16 %v1690
        %v1738 = vunpack.c.l.b16 %v1691
        %v1739 = vunpack.c.l.b16 %v1692
        %v1740 = vunpack.c.l.b16 %v1693
        %v1741 = vunpack.c.l.b16 %v1694
        %v1742 = vunpack.c.l.b16 %v1695
        %v1743 = vunpack.c.l.b16 %v1696
        %v1744 = vunpack.c.l.b16 %v1697
        %v1745 = vunpack.c.l.b16 %v1698
        %v1746 = vunpack.c.l.b16 %v1699
        %v1747 = vunpack.c.l.b16 %v1700
        %v1748 = vunpack.c.l.b16 %v1701
        %v1749 = vunpack.c.l.b16 %v1702
        %v1750 = vunpack.c.l.b16 %v1703
        %v1751 = vunpack.c.l.b16 %v1704
        %v1752 = vpack.c.b16 %v1737, %v1736
        %v1753 = vpack.c.b16 %v1739, %v1738
        %v1754 = vpack.c.b16 %v1741, %v1740
        %v1755 = vpack.c.b16 %v1743, %v1742
        %v1756 = vpack.c.b16 %v1745, %v1744
        %v1757 = vpack.c.b16 %v1747, %v1746
        %v1758 = vpack.c.b16 %v1749, %v1748
        %v1759 = vpack.c.b16 %v1751, %v1750
        %1768 = vmatprep.subr.bf16.mxu0 0
        %1769 = vmatpush1.bf16.msra.mxu0 %v1752
        %1770 = vmatprep.subr.bf16.mxu0 0
        %1771 = vmatpush1.bf16.msra.mxu0 %v1753
        %1772 = vmatprep.subr.bf16.mxu0 0
        %1773 = vmatpush1.bf16.msra.mxu0 %v1754
        %1774 = vmatprep.subr.bf16.mxu0 0
        %1775 = vmatpush1.bf16.msra.mxu0 %v1755
        %1776 = vmatprep.subr.bf16.mxu0 0
        %1777 = vmatpush1.bf16.msra.mxu0 %v1756
        %1778 = vmatprep.subr.bf16.mxu0 0
        %1779 = vmatpush1.bf16.msra.mxu0 %v1757
        %1780 = vmatprep.subr.bf16.mxu0 0
        %1781 = vmatpush1.bf16.msra.mxu0 %v1758
        %1782 = vmatprep.subr.bf16.mxu0 0
        %1783 = vmatpush1.bf16.msra.mxu0 %v1759
        %1784 = vmatprep.subr.bf16.mxu0 0
        %1785 = vmatpush1.bf16.msra.mxu0 0
        %1786 = vmatprep.subr.bf16.mxu0 0
        %1787 = vmatpush1.bf16.msra.mxu0 0
        %1788 = vmatprep.subr.bf16.mxu0 0
        %1789 = vmatpush1.bf16.msra.mxu0 0
        %1790 = vmatprep.subr.bf16.mxu0 0
        %1791 = vmatpush1.bf16.msra.mxu0 0
        %1792 = vmatprep.subr.bf16.mxu0 0
        %1793 = vmatpush1.bf16.msra.mxu0 0
        %1794 = vmatprep.subr.bf16.mxu0 0
        %1795 = vmatpush1.bf16.msra.mxu0 0
        %1796 = vmatprep.subr.bf16.mxu0 0
        %1797 = vmatpush1.bf16.msra.mxu0 0
        %1798 = vmatprep.subr.bf16.mxu0 0
        %1799 = vmatpush1.bf16.msra.mxu0 0
        %1800 = vmatprep.mubr.bf16.mxu0 0
        %1801 = vmatmul.mubr.bf16.gmra.mrb[0].mxu0 %v1718
        %v1802 = vpop.f32.mrb[0].mxu0
        %v1803 = vadd.f32 %v1710, %v1802
        %v1804 = vpop.f32.mrb[0].mxu0
        %v1805 = vpop.f32.mrb[0].mxu0
        %v1806 = vpop.f32.mrb[0].mxu0
        %1807 = vdwg.mxu0
        %1808 = vst [vmem:[%s272] sm:$0x3] %v1803
        %s1809 = sand.u32 %s181, 1
        %s1810 = scalar_lea.sflag [#allocation6], %s1809
        %s1811 = sand.u32 %s181, 1
        %s1812 = smul.addr %s1811, 2
        %s1813 = scalar_lea.vmem [#allocation5], %s1812
        // Predicated region
        $region49: #{pitom_forward.1} parent=47 // pred_check
          %p1814 = pneg %p191
        $region50: #{pitom_forward.1} parent=47 // pred_check_branch
          %1816 = sbr.rel (%p1814) target = $region52
        $region51: #{pitom_forward.1} parent=47 // pred_region
          %s1818 = ssub.s32 32, 32
          %1819 = vsyncadd %s1810, %s1818
          %s1820 = smul.addr %s21, 32
          %s1821 = scalar_lea.hbm %s7, %s1820
          %s1823 = sshll.u32 %s1813, 4
          %s1824 = int_to_ptr.vmem [resolvable:$true] %s1823
          %1826 = dma.vmem_to_hbm [thread:$0]  %s1824, 32, %s1821, %s1810
        $region52: #{pitom_forward.1} parent=47 // pred_fallthru
          _
      $region48: #{pitom_forward.1} parent=5 // pred_fallthru
        _
      %p1827 = scmp.le.s32.totalorder 2, %s16
      // Predicated region
      $region53: #{pitom_forward.1} parent=5 // pred_check
        %p1828 = pneg %p1827
      $region54: #{pitom_forward.1} parent=5 // pred_check_branch
        %1830 = sbr.rel (%p1828) target = $region56
      $region55: #{pitom_forward.1} parent=5 // pred_region
        %s1831 = ssub.s32 %s16, 2
        // Predicated region
        $region57: #{pitom_forward.1} parent=55 // pred_check
          %p1832 = pneg %p197
        $region58: #{pitom_forward.1} parent=55 // pred_check_branch
          %1834 = sbr.rel (%p1832) target = $region60
        $region59: #{pitom_forward.1} parent=55 // pred_region
          %s1835 = sand.u32 %s182, 1
          %s1836 = scalar_lea.sflag [#allocation6], %s1835
          %s1837 = sand.u32 %s182, 1
          %s1838 = smul.addr %s1837, 2
          %s1839 = scalar_lea.vmem [#allocation5], %s1838
          %1840 = dma.done %s1836, 32
        $region60: #{pitom_forward.1} parent=55 // pred_fallthru
          _
      $region56: #{pitom_forward.1} parent=5 // pred_fallthru
        _
    $region6: #{pitom_forward.1} parent=1 // loop_footer
      %s20 = sadd.s32 1, %s16
    $region7: #{pitom_forward.1} parent=1 // loop_footer_branch
      %15 = sbr.rel target = $region3
    $region8: #{pitom_forward.1} parent=1 // loop_exit
      _
    %1841 = vsyncpa [#allocation6], 1
    %s1842 = scalar_lea.sflag [#allocation6], 1
    %1843 = vsyncpa %s1842, 1

</llo_original>
